<compile_context>
chip_gen: v5e
topology: v5e:2x2
jax: 0.10.0
libtpu: 0.0.40
codegen_flags: <defaults>
</compile_context>

<pallas_src>
import functools

import jax
import jax.numpy as jnp
from jax.experimental import pallas as pl
from jax.experimental.pallas import tpu as pltpu


_NUM_TILES = 2                      # >=2 so the grid shards across v7x's 2 TCs.
_VMEM_LIMIT = 32 * 1024 * 1024      # safe on v5e/v6e (128 MiB) and v7x (64 MiB).


def _round_up(x, m):
    return (x + m - 1) // m * m


# ----------------------------- Pallas kernels --------------------------------
def _deconv_mm_kernel(x_ref, w_ref, b_ref, o_ref, *, apply_relu):
    """(rows, 4*Cin)bf16 @ (4*Cin, 4*Cout)bf16 -> f32 acc, + bias (+ ReLU)."""
    acc = jnp.dot(x_ref[...], w_ref[...], preferred_element_type=jnp.float32)
    acc = acc + b_ref[...]
    if apply_relu:
        acc = jnp.maximum(acc, 0.0)
    o_ref[...] = acc.astype(o_ref.dtype)


def _deconv_mm_t_kernel(w_ref, x_ref, b_ref, o_ref):
    """Transposed last layer: (P, 4*Cin) @ (4*Cin, cols) + bias column.

    P = round_up(4*Cout, 8) sits on sublanes; cols (spatial positions) are the
    lane-dense dimension, avoiding masked vst stores for tiny Cout.
    """
    acc = jnp.dot(w_ref[...], x_ref[...], preferred_element_type=jnp.float32)
    o_ref[...] = (acc + b_ref[...]).astype(o_ref.dtype)


# ----------------------------- layer wrappers ---------------------------------
def _phase_slab(x):
    """(B, H, W, C) NHWC -> (B*(H+1)*(W+1), 4C) slab [x | x+w | x+h | x+h+w].

    Built from a high-end zero-padded 4-D array, so the shifted reads are exact
    zeros at image edges and never cross batch boundaries; every slab row is
    self-contained (row tiling needs no halo).
    """
    B, H, W, C = x.shape
    Hp, Wp = H + 1, W + 1
    xp = jnp.pad(x, ((0, 0), (0, 2), (0, 2), (0, 0)))
    slab = jnp.concatenate([
        xp[:, 0:Hp, 0:Wp, :],
        xp[:, 0:Hp, 1:Wp + 1, :],
        xp[:, 1:Hp + 1, 0:Wp, :],
        xp[:, 1:Hp + 1, 1:Wp + 1, :],
    ], axis=-1)
    return slab.reshape(B * Hp * Wp, 4 * C)


def _deconv_layer(x, w_big, b4, *, apply_relu):
    """ConvTranspose2d(k3,s2,p1,op1) (+ReLU) via one phase-packed MXU matmul.

    x:     (B, H, W, Cin) NHWC
    w_big: (4*Cin, 4*Cout) bf16 phase-packed weight
    b4:    (1, 4*Cout) f32 phase-tiled bias
    ->     (B, 2H, 2W, Cout) bf16
    """
    B, H, W, Cin = x.shape
    Hp, Wp = H + 1, W + 1
    n_rows = B * Hp * Wp
    K, Nout = w_big.shape
    assert K == 4 * Cin, (K, Cin)
    Cout = Nout // 4

    slab = _phase_slab(x.astype(jnp.bfloat16))
    row_tile = _round_up(pl.cdiv(n_rows, _NUM_TILES), 8)     # sublane aligned
    n_pad = _NUM_TILES * row_tile
    slab = jnp.pad(slab, ((0, n_pad - n_rows), (0, 0)))

    out = pl.pallas_call(
        functools.partial(_deconv_mm_kernel, apply_relu=apply_relu),
        grid=(_NUM_TILES,),
        in_specs=[
            pl.BlockSpec((row_tile, K), lambda i: (i, 0)),    # activation slab
            pl.BlockSpec((K, Nout), lambda i: (0, 0)),        # weight (resident)
            pl.BlockSpec((1, Nout), lambda i: (0, 0)),        # bias
        ],
        out_specs=pl.BlockSpec((row_tile, Nout), lambda i: (i, 0)),
        out_shape=jax.ShapeDtypeStruct((n_pad, Nout), jnp.bfloat16),
        compiler_params=pltpu.CompilerParams(
            dimension_semantics=("parallel",),
            vmem_limit_bytes=_VMEM_LIMIT),
    )(slab, w_big, b4)

    # Depth-to-space (pure layout, fused by XLA): lanes pack (dh, dw, c).
    y = out[:n_rows].reshape(B, Hp, Wp, 2, 2, Cout)[:, :H, :W]
    return jnp.transpose(y, (0, 1, 3, 2, 4, 5)).reshape(B, 2 * H, 2 * W, Cout)


def _deconv_layer_lanewise(x, w_t, b_col, cout):
    """Last ConvTranspose2d, computed transposed for a lane-dense output.

    x:     (B, H, W, Cin) NHWC
    w_t:   (P, 4*Cin) bf16, P = round_up(4*Cout, 8); rows >= 4*Cout are zero
    b_col: (P, 1) f32
    ->     (B, 2H, 2W, Cout) f32
    """
    B, H, W, Cin = x.shape
    Hp, Wp = H + 1, W + 1
    n_cols = B * Hp * Wp
    P, K = w_t.shape
    assert K == 4 * Cin, (K, Cin)

    slab_t = _phase_slab(x.astype(jnp.bfloat16)).T            # (4*Cin, n_cols)
    col_tile = _round_up(pl.cdiv(n_cols, _NUM_TILES), 128)    # lane aligned
    n_pad = _NUM_TILES * col_tile
    slab_t = jnp.pad(slab_t, ((0, 0), (0, n_pad - n_cols)))

    out = pl.pallas_call(
        _deconv_mm_t_kernel,
        grid=(_NUM_TILES,),
        in_specs=[
            pl.BlockSpec((P, K), lambda i: (0, 0)),           # weight (resident)
            pl.BlockSpec((K, col_tile), lambda i: (0, i)),    # activation slab^T
            pl.BlockSpec((P, 1), lambda i: (0, 0)),           # bias column
        ],
        out_specs=pl.BlockSpec((P, col_tile), lambda i: (0, i)),
        out_shape=jax.ShapeDtypeStruct((P, n_pad), jnp.float32),
        compiler_params=pltpu.CompilerParams(
            dimension_semantics=("parallel",),
            vmem_limit_bytes=_VMEM_LIMIT),
    )(w_t, slab_t, b_col)

    # Rows pack (dh, dw, c); columns pack (b, h, w).  Depth-to-space once.
    y = out[:4 * cout, :n_cols].reshape(2, 2, cout, B, Hp, Wp)
    y = jnp.transpose(y, (3, 4, 0, 5, 1, 2))[:, :H, :, :W]    # (B,H,2,W,2,Cout)
    return y.reshape(B, 2 * H, 2 * W, cout)


# ----------------------------- weight packing ---------------------------------
def _pack_phase_weight(w):
    """PyTorch ConvTranspose2d weight (Cin, Cout, 3, 3) -> (4*Cin, 4*Cout).

    Rows: [x | x(+col) | x(+row) | x(+row,+col)]; columns: output phases
    [even-even | even-odd | odd-even | odd-odd], each Cout wide.  7/16 blocks
    are structural zeros; kept packed while the 4*Cin contraction matches the
    256-deep MXU.  TODO(synk): for Cin >= 128 per phase, split into per-phase
    matmuls using only the nonzero taps.
    """
    cin, cout = w.shape[0], w.shape[1]
    wk = jnp.transpose(w, (2, 3, 0, 1)).astype(jnp.float32)   # (kh, kw, Cin, Cout)
    z = jnp.zeros((cin, cout), jnp.float32)
    return jnp.concatenate([
        jnp.concatenate([wk[1, 1], wk[1, 2], wk[2, 1], wk[2, 2]], axis=1),
        jnp.concatenate([z,        wk[1, 0], z,        wk[2, 0]], axis=1),
        jnp.concatenate([z,        z,        wk[0, 1], wk[0, 2]], axis=1),
        jnp.concatenate([z,        z,        z,        wk[0, 0]], axis=1),
    ], axis=0)


def pack_params(params):
    """Pack / cast weights once, outside the per-step path."""
    w1 = _pack_phase_weight(params["w1"]).astype(jnp.bfloat16)
    b1 = jnp.tile(params["b1"].astype(jnp.float32), 4)[None, :]
    w2 = _pack_phase_weight(params["w2"]).astype(jnp.bfloat16)
    b2 = jnp.tile(params["b2"].astype(jnp.float32), 4)[None, :]

    w3 = _pack_phase_weight(params["w3"])                     # (4*Cin3, 4*Cout3)
    cout3 = params["w3"].shape[1]
    p = _round_up(4 * cout3, 8)
    w3_t = jnp.zeros((p, w3.shape[0]), jnp.float32).at[:4 * cout3].set(w3.T)
    b3_col = jnp.zeros((p, 1), jnp.float32).at[:4 * cout3, 0].set(
        jnp.tile(params["b3"].astype(jnp.float32), 4))
    return {"w1": w1, "b1": b1, "w2": w2, "b2": b2,
            "w3t": w3_t.astype(jnp.bfloat16), "b3": b3_col}


@functools.partial(jax.jit, static_argnames=("out_channels",))
def cnn_decoder(x_nchw, packed, out_channels=1):
    """Pallas forward of the PyTorch CNNDecoder (NCHW in, NCHW out)."""
    x = jnp.transpose(x_nchw, (0, 2, 3, 1))                   # NHWC
    x = _deconv_layer(x, packed["w1"], packed["b1"], apply_relu=True)
    x = _deconv_layer(x, packed["w2"], packed["b2"], apply_relu=True)
    x = _deconv_layer_lanewise(x, packed["w3t"], packed["b3"], out_channels)
    return jnp.transpose(x, (0, 3, 1, 2))                     # NCHW


# ----------------------------- plain-XLA reference ----------------------------
def _conv_transpose2d_ref(x, w, b):
    """ConvTranspose2d(k=3, s=2, p=1, op=1) on NHWC via dilated conv identity."""
    v = jnp.flip(w, axis=(2, 3)).transpose(2, 3, 0, 1)        # HWIO, flipped
    y = jax.lax.conv_general_dilated(
        x, v, window_strides=(1, 1), padding=((1, 2), (1, 2)),
        lhs_dilation=(2, 2), rhs_dilation=(1, 1),
        dimension_numbers=("NHWC", "HWIO", "NHWC"),
        precision=jax.lax.Precision.HIGHEST)
    return y + b[None, None, None, :]


@functools.partial(jax.jit, static_argnames=("bf16_operands",))
def cnn_decoder_ref(x_nchw, params, bf16_operands=False):
    """Reference.  With bf16_operands=True it applies the same bf16 operand /
    activation rounding as the Pallas kernels (f32 accumulation), so it should
    match the kernel output almost exactly."""
    if bf16_operands:
        q = lambda a: a.astype(jnp.bfloat16).astype(jnp.float32)
    else:
        q = lambda a: a
    x = jnp.transpose(x_nchw, (0, 2, 3, 1))
    x = jax.nn.relu(_conv_transpose2d_ref(q(x), q(params["w1"]), params["b1"]))
    x = jax.nn.relu(_conv_transpose2d_ref(q(x), q(params["w2"]), params["b2"]))
    x = _conv_transpose2d_ref(q(x), q(params["w3"]), params["b3"])
    return jnp.transpose(x, (0, 3, 1, 2))


if __name__ == "__main__":
    B, hidden_dim, Hs, Ws = 2, 64, 8, 8
    out_channels = 1

    key = jax.random.PRNGKey(0)
    ks = jax.random.split(key, 7)
    x = jax.random.normal(ks[0], (B, hidden_dim, Hs, Ws), dtype=jnp.float32)
    params = {
        "w1": 0.1 * jax.random.normal(ks[1], (hidden_dim, 64, 3, 3), jnp.float32),
        "b1": 0.1 * jax.random.normal(ks[2], (64,), jnp.float32),
        "w2": 0.1 * jax.random.normal(ks[3], (64, 32, 3, 3), jnp.float32),
        "b2": 0.1 * jax.random.normal(ks[4], (32,), jnp.float32),
        "w3": 0.1 * jax.random.normal(ks[5], (32, out_channels, 3, 3), jnp.float32),
        "b3": 0.1 * jax.random.normal(ks[6], (out_channels,), jnp.float32),
    }

    packed = pack_params(params)                              # packed once
    out = jax.block_until_ready(cnn_decoder(x, packed, out_channels=out_channels))

    # Precision-matched reference (same bf16 operand rounding, f32 accumulation)
    # and a full-f32 reference for sanity.
    ref_matched = jax.block_until_ready(cnn_decoder_ref(x, params, bf16_operands=True))
    ref_f32 = jax.block_until_ready(cnn_decoder_ref(x, params, bf16_operands=False))

    assert out.shape == (B, out_channels, 8 * Hs, 8 * Ws), out.shape
    assert out.dtype == jnp.float32
    err_matched = float(jnp.max(jnp.abs(out - ref_matched)))
    err_f32 = float(jnp.max(jnp.abs(out - ref_f32)))
    # Tight check vs. the precision-matched reference (differences are only
    # f32 summation order + occasional one-ulp bf16 re-rounding).
    assert jnp.allclose(out, ref_matched, atol=5e-3, rtol=5e-3), err_matched
    # Sanity check vs. full f32: tolerance at the expected bf16-operand scale.
    assert jnp.allclose(out, ref_f32, atol=4e-2, rtol=4e-2), err_f32

    print("KERNEL_OK")
</pallas_src>

<mosaic_0001>
module attributes {stable_mosaic.version = 11 : i64} {
  func.func @_deconv_mm_kernel(%arg0: i32, %arg1: memref<88x256xbf16, #tpu.memory_space<vmem>>, %arg2: memref<256x256xbf16, #tpu.memory_space<vmem>>, %arg3: memref<1x256xf32, #tpu.memory_space<vmem>>, %arg4: memref<88x256xbf16, #tpu.memory_space<vmem>>) attributes {dimension_semantics = [#tpu.dimension_semantics<parallel>], iteration_bounds = array<i64: 2>, scalar_prefetch = 0 : i64, scratch_operands = 0 : i64, tpu.core_type = #tpu.core_type<tc>, window_params = [{transform_indices = @transform_0, window_bounds = array<i64: 88, 256>}, {pipeline_mode = #tpu.pipeline_mode<synchronous>, transform_indices = @transform_1, window_bounds = array<i64: 256, 256>}, {pipeline_mode = #tpu.pipeline_mode<synchronous>, transform_indices = @transform_2, window_bounds = array<i64: 1, 256>}, {transform_indices = @transform_3, window_bounds = array<i64: 88, 256>}]} {
    %c0 = arith.constant 0 : index
    %c0_0 = arith.constant 0 : index
    %0 = vector.load %arg1[%c0, %c0_0] : memref<88x256xbf16, #tpu.memory_space<vmem>>, vector<88x256xbf16>
    %c0_1 = arith.constant 0 : index
    %c0_2 = arith.constant 0 : index
    %1 = vector.load %arg2[%c0_1, %c0_2] : memref<256x256xbf16, #tpu.memory_space<vmem>>, vector<256x256xbf16>
    %cst = arith.constant dense<0.000000e+00> : vector<88x256xf32>
    %2 = tpu.matmul %0, %1, %cst {dimension_numbers = #tpu.dot_dimension_numbers<[1], [0], [0], [1], [0, 0, 1, 1], [], []>} : vector<88x256xbf16>, vector<256x256xbf16>, vector<88x256xf32> -> vector<88x256xf32>
    %c0_3 = arith.constant 0 : index
    %c0_4 = arith.constant 0 : index
    %3 = vector.load %arg3[%c0_3, %c0_4] : memref<1x256xf32, #tpu.memory_space<vmem>>, vector<1x256xf32>
    %4 = vector.broadcast %3 : vector<1x256xf32> to vector<88x256xf32>
    %5 = arith.addf %2, %4 : vector<88x256xf32>
    %cst_5 = arith.constant 0.000000e+00 : f32
    %6 = vector.broadcast %cst_5 : f32 to vector<88x256xf32>
    %7 = arith.maximumf %5, %6 : vector<88x256xf32>
    %8 = arith.truncf %7 : vector<88x256xf32> to vector<88x256xbf16>
    %c0_6 = arith.constant 0 : index
    %c0_7 = arith.constant 0 : index
    %9 = vector.load %arg4[%c0_6, %c0_7] : memref<88x256xbf16, #tpu.memory_space<vmem>>, vector<88x256xbf16>
    tpu.vector_store %arg4[%c0_6, %c0_7], %8 {strides = array<i32>} : memref<88x256xbf16, #tpu.memory_space<vmem>>, vector<88x256xbf16>,
    return
  }
  func.func @transform_0(%arg0: i32) -> (i32, i32) {
    %c0_i32 = arith.constant 0 : i32
    %c0_i32_0 = arith.constant 0 : i32
    return %arg0, %c0_i32 : i32, i32
  }
  func.func @transform_1(%arg0: i32) -> (i32, i32) {
    %c0_i32 = arith.constant 0 : i32
    %c0_i32_0 = arith.constant 0 : i32
    %c0_i32_1 = arith.constant 0 : i32
    return %c0_i32, %c0_i32_0 : i32, i32
  }
  func.func @transform_2(%arg0: i32) -> (i32, i32) {
    %c0_i32 = arith.constant 0 : i32
    %c0_i32_0 = arith.constant 0 : i32
    %c0_i32_1 = arith.constant 0 : i32
    return %c0_i32, %c0_i32_0 : i32, i32
  }
  func.func @transform_3(%arg0: i32) -> (i32, i32) {
    %c0_i32 = arith.constant 0 : i32
    %c0_i32_0 = arith.constant 0 : i32
    return %arg0, %c0_i32 : i32, i32
  }
}

module attributes {stable_mosaic.version = 11 : i64} {
  func.func @_deconv_mm_kernel(%arg0: i32, %arg1: memref<296x256xbf16, #tpu.memory_space<vmem>>, %arg2: memref<256x128xbf16, #tpu.memory_space<vmem>>, %arg3: memref<1x128xf32, #tpu.memory_space<vmem>>, %arg4: memref<296x128xbf16, #tpu.memory_space<vmem>>) attributes {dimension_semantics = [#tpu.dimension_semantics<parallel>], iteration_bounds = array<i64: 2>, scalar_prefetch = 0 : i64, scratch_operands = 0 : i64, tpu.core_type = #tpu.core_type<tc>, window_params = [{transform_indices = @transform_0, window_bounds = array<i64: 296, 256>}, {pipeline_mode = #tpu.pipeline_mode<synchronous>, transform_indices = @transform_1, window_bounds = array<i64: 256, 128>}, {pipeline_mode = #tpu.pipeline_mode<synchronous>, transform_indices = @transform_2, window_bounds = array<i64: 1, 128>}, {transform_indices = @transform_3, window_bounds = array<i64: 296, 128>}]} {
    %c0 = arith.constant 0 : index
    %c0_0 = arith.constant 0 : index
    %0 = vector.load %arg1[%c0, %c0_0] : memref<296x256xbf16, #tpu.memory_space<vmem>>, vector<296x256xbf16>
    %c0_1 = arith.constant 0 : index
    %c0_2 = arith.constant 0 : index
    %1 = vector.load %arg2[%c0_1, %c0_2] : memref<256x128xbf16, #tpu.memory_space<vmem>>, vector<256x128xbf16>
    %cst = arith.constant dense<0.000000e+00> : vector<296x128xf32>
    %2 = tpu.matmul %0, %1, %cst {dimension_numbers = #tpu.dot_dimension_numbers<[1], [0], [0], [1], [0, 0, 1, 1], [], []>} : vector<296x256xbf16>, vector<256x128xbf16>, vector<296x128xf32> -> vector<296x128xf32>
    %c0_3 = arith.constant 0 : index
    %c0_4 = arith.constant 0 : index
    %3 = vector.load %arg3[%c0_3, %c0_4] : memref<1x128xf32, #tpu.memory_space<vmem>>, vector<1x128xf32>
    %4 = vector.broadcast %3 : vector<1x128xf32> to vector<296x128xf32>
    %5 = arith.addf %2, %4 : vector<296x128xf32>
    %cst_5 = arith.constant 0.000000e+00 : f32
    %6 = vector.broadcast %cst_5 : f32 to vector<296x128xf32>
    %7 = arith.maximumf %5, %6 : vector<296x128xf32>
    %8 = arith.truncf %7 : vector<296x128xf32> to vector<296x128xbf16>
    %c0_6 = arith.constant 0 : index
    %c0_7 = arith.constant 0 : index
    %9 = vector.load %arg4[%c0_6, %c0_7] : memref<296x128xbf16, #tpu.memory_space<vmem>>, vector<296x128xbf16>
    tpu.vector_store %arg4[%c0_6, %c0_7], %8 {strides = array<i32>} : memref<296x128xbf16, #tpu.memory_space<vmem>>, vector<296x128xbf16>,
    return
  }
  func.func @transform_0(%arg0: i32) -> (i32, i32) {
    %c0_i32 = arith.constant 0 : i32
    %c0_i32_0 = arith.constant 0 : i32
    return %arg0, %c0_i32 : i32, i32
  }
  func.func @transform_1(%arg0: i32) -> (i32, i32) {
    %c0_i32 = arith.constant 0 : i32
    %c0_i32_0 = arith.constant 0 : i32
    %c0_i32_1 = arith.constant 0 : i32
    return %c0_i32, %c0_i32_0 : i32, i32
  }
  func.func @transform_2(%arg0: i32) -> (i32, i32) {
    %c0_i32 = arith.constant 0 : i32
    %c0_i32_0 = arith.constant 0 : i32
    %c0_i32_1 = arith.constant 0 : i32
    return %c0_i32, %c0_i32_0 : i32, i32
  }
  func.func @transform_3(%arg0: i32) -> (i32, i32) {
    %c0_i32 = arith.constant 0 : i32
    %c0_i32_0 = arith.constant 0 : i32
    return %arg0, %c0_i32 : i32, i32
  }
}

module attributes {stable_mosaic.version = 11 : i64} {
  func.func @_deconv_mm_t_kernel(%arg0: i32, %arg1: memref<8x128xbf16, #tpu.memory_space<vmem>>, %arg2: memref<128x1152xbf16, #tpu.memory_space<vmem>>, %arg3: memref<8x1xf32, #tpu.memory_space<vmem>>, %arg4: memref<8x1152xf32, #tpu.memory_space<vmem>>) attributes {dimension_semantics = [#tpu.dimension_semantics<parallel>], iteration_bounds = array<i64: 2>, scalar_prefetch = 0 : i64, scratch_operands = 0 : i64, tpu.core_type = #tpu.core_type<tc>, window_params = [{pipeline_mode = #tpu.pipeline_mode<synchronous>, transform_indices = @transform_0, window_bounds = array<i64: 8, 128>}, {transform_indices = @transform_1, window_bounds = array<i64: 128, 1152>}, {pipeline_mode = #tpu.pipeline_mode<synchronous>, transform_indices = @transform_2, window_bounds = array<i64: 8, 1>}, {transform_indices = @transform_3, window_bounds = array<i64: 8, 1152>}]} {
    %c0 = arith.constant 0 : index
    %c0_0 = arith.constant 0 : index
    %0 = vector.load %arg1[%c0, %c0_0] : memref<8x128xbf16, #tpu.memory_space<vmem>>, vector<8x128xbf16>
    %c0_1 = arith.constant 0 : index
    %c0_2 = arith.constant 0 : index
    %1 = vector.load %arg2[%c0_1, %c0_2] : memref<128x1152xbf16, #tpu.memory_space<vmem>>, vector<128x1152xbf16>
    %cst = arith.constant dense<0.000000e+00> : vector<8x1152xf32>
    %2 = tpu.matmul %0, %1, %cst {dimension_numbers = #tpu.dot_dimension_numbers<[1], [0], [0], [1], [0, 0, 1, 1], [], []>} : vector<8x128xbf16>, vector<128x1152xbf16>, vector<8x1152xf32> -> vector<8x1152xf32>
    %c0_3 = arith.constant 0 : index
    %c0_4 = arith.constant 0 : index
    %3 = vector.load %arg3[%c0_3, %c0_4] : memref<8x1xf32, #tpu.memory_space<vmem>>, vector<8x1xf32>
    %4 = vector.broadcast %3 : vector<8x1xf32> to vector<8x1152xf32>
    %5 = arith.addf %2, %4 : vector<8x1152xf32>
    %c0_5 = arith.constant 0 : index
    %c0_6 = arith.constant 0 : index
    %6 = vector.load %arg4[%c0_5, %c0_6] : memref<8x1152xf32, #tpu.memory_space<vmem>>, vector<8x1152xf32>
    tpu.vector_store %arg4[%c0_5, %c0_6], %5 {strides = array<i32>} : memref<8x1152xf32, #tpu.memory_space<vmem>>, vector<8x1152xf32>,
    return
  }
  func.func @transform_0(%arg0: i32) -> (i32, i32) {
    %c0_i32 = arith.constant 0 : i32
    %c0_i32_0 = arith.constant 0 : i32
    %c0_i32_1 = arith.constant 0 : i32
    return %c0_i32, %c0_i32_0 : i32, i32
  }
  func.func @transform_1(%arg0: i32) -> (i32, i32) {
    %c0_i32 = arith.constant 0 : i32
    %c0_i32_0 = arith.constant 0 : i32
    return %c0_i32, %arg0 : i32, i32
  }
  func.func @transform_2(%arg0: i32) -> (i32, i32) {
    %c0_i32 = arith.constant 0 : i32
    %c0_i32_0 = arith.constant 0 : i32
    %c0_i32_1 = arith.constant 0 : i32
    return %c0_i32, %c0_i32_0 : i32, i32
  }
  func.func @transform_3(%arg0: i32) -> (i32, i32) {
    %c0_i32 = arith.constant 0 : i32
    %c0_i32_0 = arith.constant 0 : i32
    return %c0_i32, %arg0 : i32, i32
  }
}

</mosaic_0001>

<llo_original>
// kernel: cnn_decoder.3
$region0: #{cnn_decoder.3}
  #allocation0 [shape = 'u32[]', space=smem, size = 0x4, offset = 0x4, fixed_abs, tag = 'smem constant byte address 0x4 - core index']
  #allocation1 [shape = 'u32[72,128]{1,0:T(1,128)}', space=vmem, size = 0x9000, scoped, tag = 'internal scratch']
  %s0 = inlined_call_operand.vmem [shape: bf16[176,256], index: 0, kind: input, shape index: {}]
  %s1 = inlined_call_operand.hbm [shape: bf16[256,256], index: 1, kind: input, shape index: {}]
  %s2 = inlined_call_operand.hbm [shape: f32[1,256], index: 2, kind: input, shape index: {}]
  %s3 = inlined_call_operand.vmem [shape: bf16[176,256], index: 3, kind: output, shape index: {}]
  %s4 = sld [smem:[#allocation0]]
  $region53: #{cnn_decoder.3} parent=0
    _
  %s6 = ssub.s32 1, %s4
  %s7 = scalar_select 0, %s6, %s4
  $region1: #{cnn_decoder.3} parent=0
    #allocation2 [shape = 'u8[131072]{0}', space=vmem, size = 0x20000, scoped, tag = 'input window, operand 1, single buffered']
    #allocation3 [shape = 's32[2]{0}', space=sflag, size = 0x8, scoped, tag = 'scoped memory for cnn_decoder.3']
    #allocation4 [shape = 'u8[1024]{0}', space=vmem, size = 0x400, scoped, tag = 'input window, operand 2, single buffered']
    #allocation5 [shape = 's32[1]{0}', space=sflag, size = 0x4, scoped, tag = 'scoped memory for cnn_decoder.3']
    %8 = vsyncpa [#allocation3], 0
    %9 = vsyncpa [#allocation5], 0
    loop: start=0, step=1, limit=4
    $region2: #{cnn_decoder.3} parent=1 // loop_pre_header
      _
    $region3: #{cnn_decoder.3} parent=1 // loop_header
      %s11 = sphi 0, %s15
      %p12 = scmp.ge.s32.totalorder %s11, 4
      %s21 = sphi 0, %s23
      %s24 = sphi 0, %s21
      %s25 = sphi 0, %s24
      %s41 = sphi 0, %s25
      %s45 = sphi 0, %s45
      %s47 = sphi 0, %s45
      %s48 = sphi 0, %s47
      %s62 = sphi 0, %s48
      %s66 = sphi 0, %s66
      %s68 = sphi 0, %s66
      %s69 = sphi 0, %s68
      %s83 = sphi 0, %s69
      %s89 = sphi 0, %s91
      %s92 = sphi 0, %s89
      %s93 = sphi 0, %s92
      %s109 = sphi 0, %s93
    $region4: #{cnn_decoder.3} parent=1 // loop_header_branch
      %14 = sbr.rel (%p12) target = $region8
    $region5: #{cnn_decoder.3} parent=1 // loop_body
      %s16 = ssub.s32 %s11, 1
      %s17 = ssub.s32 %s11, 2
      %s18 = sadd.s32 %s11, 1
      %s19 = ssub.s32 %s11, %s18
      %p20 = scmp.eq.s32.totalorder %s19, 0
      %s22 = sadd.s32 %s21, 1
      %s23 = scalar_select %p20, %s21, %s22
      %p26 = pneg %p20
      %p27 = scmp.eq.s32.totalorder %s11, 1
      %p28 = por %p26, %p27
      %p29 = scmp.ne.s32.totalorder %s21, %s24
      %p30 = scmp.eq.s32.totalorder %s11, 0
      %p31 = por %p29, %p30
      %p32 = scmp.ne.s32.totalorder %s21, %s24
      %p33 = scmp.eq.s32.totalorder %s16, 1
      %p34 = por %p32, %p33
      %p35 = scmp.ne.s32.totalorder %s24, %s25
      %p36 = scmp.eq.s32.totalorder %s16, 0
      %p37 = por %p35, %p36
      %p38 = scmp.ne.s32.totalorder %s24, %s25
      %p39 = scmp.eq.s32.totalorder %s17, 1
      %p40 = por %p38, %p39
      %p42 = scmp.ne.s32.totalorder %s25, %s41
      %p43 = scmp.eq.s32.totalorder %s17, 0
      %p44 = por %p42, %p43
      %s46 = sadd.s32 %s45, 1
      %p49 = scmp.eq.s32.totalorder %s11, 1
      %p50 = scmp.ne.s32.totalorder %s45, %s47
      %p51 = scmp.eq.s32.totalorder %s11, 0
      %p52 = por %p50, %p51
      %p53 = scmp.ne.s32.totalorder %s45, %s47
      %p54 = scmp.eq.s32.totalorder %s16, 1
      %p55 = por %p53, %p54
      %p56 = scmp.ne.s32.totalorder %s47, %s48
      %p57 = scmp.eq.s32.totalorder %s16, 0
      %p58 = por %p56, %p57
      %p59 = scmp.ne.s32.totalorder %s47, %s48
      %p60 = scmp.eq.s32.totalorder %s17, 1
      %p61 = por %p59, %p60
      %p63 = scmp.ne.s32.totalorder %s48, %s62
      %p64 = scmp.eq.s32.totalorder %s17, 0
      %p65 = por %p63, %p64
      %s67 = sadd.s32 %s66, 1
      %p70 = scmp.eq.s32.totalorder %s11, 1
      %p71 = scmp.ne.s32.totalorder %s66, %s68
      %p72 = scmp.eq.s32.totalorder %s11, 0
      %p73 = por %p71, %p72
      %p74 = scmp.ne.s32.totalorder %s66, %s68
      %p75 = scmp.eq.s32.totalorder %s16, 1
      %p76 = por %p74, %p75
      %p77 = scmp.ne.s32.totalorder %s68, %s69
      %p78 = scmp.eq.s32.totalorder %s16, 0
      %p79 = por %p77, %p78
      %p80 = scmp.ne.s32.totalorder %s68, %s69
      %p81 = scmp.eq.s32.totalorder %s17, 1
      %p82 = por %p80, %p81
      %p84 = scmp.ne.s32.totalorder %s69, %s83
      %p85 = scmp.eq.s32.totalorder %s17, 0
      %p86 = por %p84, %p85
      %s87 = ssub.s32 %s11, %s18
      %p88 = scmp.eq.s32.totalorder %s87, 0
      %s90 = sadd.s32 %s89, 1
      %s91 = scalar_select %p88, %s89, %s90
      %p94 = pneg %p88
      %p95 = scmp.eq.s32.totalorder %s11, 1
      %p96 = por %p94, %p95
      %p97 = scmp.ne.s32.totalorder %s89, %s92
      %p98 = scmp.eq.s32.totalorder %s11, 0
      %p99 = por %p97, %p98
      %p100 = scmp.ne.s32.totalorder %s89, %s92
      %p101 = scmp.eq.s32.totalorder %s16, 1
      %p102 = por %p100, %p101
      %p103 = scmp.ne.s32.totalorder %s92, %s93
      %p104 = scmp.eq.s32.totalorder %s16, 0
      %p105 = por %p103, %p104
      %p106 = scmp.ne.s32.totalorder %s92, %s93
      %p107 = scmp.eq.s32.totalorder %s17, 1
      %p108 = por %p106, %p107
      %p110 = scmp.ne.s32.totalorder %s93, %s109
      %p111 = scmp.eq.s32.totalorder %s17, 0
      %p112 = por %p110, %p111
      %p113 = scmp.le.s32.totalorder 1, %s11
      %p114 = scmp.lt.s32.totalorder %s11, 3
      %p115 = pnand %p113, %p114
      %p116 = pneg %p115
      // Predicated region
      $region9: #{cnn_decoder.3} parent=5 // pred_check
        _
      $region10: #{cnn_decoder.3} parent=5 // pred_check_branch
        %118 = sbr.rel (%p115) target = $region12
      $region11: #{cnn_decoder.3} parent=5 // pred_region
        %s119 = ssub.s32 %s11, 1
        // Predicated region
        $region13: #{cnn_decoder.3} parent=11 // pred_check
          %p120 = pneg %p58
        $region14: #{cnn_decoder.3} parent=11 // pred_check_branch
          %122 = sbr.rel (%p120) target = $region16
        $region15: #{cnn_decoder.3} parent=11 // pred_region
          %124 = vsyncadd [#allocation3], 0
          %s125 = sshll.u32 %s1, 4
          %s126 = int_to_ptr.hbm [resolvable:$true] %s125
          %s127 = sshll.u32 [#allocation2], 4
          %s128 = int_to_ptr.vmem [resolvable:$true] %s127
          %133 = dma.hbm_to_vmem [thread:$0]  %s126, 4096, %s128, [#allocation3], 128, 128, 8
        $region16: #{cnn_decoder.3} parent=11 // pred_fallthru
          _
        // Predicated region
        $region17: #{cnn_decoder.3} parent=11 // pred_check
          %p134 = pneg %p79
        $region18: #{cnn_decoder.3} parent=11 // pred_check_branch
          %136 = sbr.rel (%p134) target = $region20
        $region19: #{cnn_decoder.3} parent=11 // pred_region
          %138 = vsyncadd [#allocation5], 0
          %s140 = sshll.u32 %s2, 4
          %s141 = int_to_ptr.hbm [resolvable:$true] %s140
          %s142 = sshll.u32 [#allocation4], 4
          %s143 = int_to_ptr.vmem [resolvable:$true] %s142
          %145 = dma.hbm_to_vmem [thread:$0]  %s141, 32, %s143, [#allocation5]
        $region20: #{cnn_decoder.3} parent=11 // pred_fallthru
          _
      $region12: #{cnn_decoder.3} parent=5 // pred_fallthru
        _
      %p146 = scmp.lt.s32.totalorder %s11, 2
      // Predicated region
      $region21: #{cnn_decoder.3} parent=5 // pred_check
        %p147 = pneg %p146
      $region22: #{cnn_decoder.3} parent=5 // pred_check_branch
        %149 = sbr.rel (%p147) target = $region24
      $region23: #{cnn_decoder.3} parent=5 // pred_region
        // Predicated region
        $region25: #{cnn_decoder.3} parent=23 // pred_check
          %p150 = pneg %p31
        $region26: #{cnn_decoder.3} parent=23 // pred_check_branch
          %152 = sbr.rel (%p150) target = $region28
        $region27: #{cnn_decoder.3} parent=23 // pred_region
          %s153 = smul.u32 11, %s11
          %p154 = scmp.lt.s32.totalorder %s153, 21
          %s155 = scalar_select %p154, %s153, 21
          %s156 = smul.addr %s155, 2
          %s157 = smul.addr %s156, 4
          %s158 = scalar_lea.vmem %s0, %s157
          %s159 = smul.u32 11, %s11
        $region28: #{cnn_decoder.3} parent=23 // pred_fallthru
          _
      $region24: #{cnn_decoder.3} parent=5 // pred_fallthru
        _
      %p160 = scmp.le.s32.totalorder 1, %s11
      %p161 = scmp.lt.s32.totalorder %s11, 3
      %p162 = pnand %p160, %p161
      %p163 = pneg %p162
      // Predicated region
      $region29: #{cnn_decoder.3} parent=5 // pred_check
        _
      $region30: #{cnn_decoder.3} parent=5 // pred_check_branch
        %165 = sbr.rel (%p162) target = $region32
      $region31: #{cnn_decoder.3} parent=5 // pred_region
        %s166 = ssub.s32 %s11, 1
        // Predicated region
        $region33: #{cnn_decoder.3} parent=31 // pred_check
          %p167 = pneg %p58
        $region34: #{cnn_decoder.3} parent=31 // pred_check_branch
          %169 = sbr.rel (%p167) target = $region36
        $region35: #{cnn_decoder.3} parent=31 // pred_region
          %171 = dma.done [#allocation3], 4096
        $region36: #{cnn_decoder.3} parent=31 // pred_fallthru
          _
        // Predicated region
        $region37: #{cnn_decoder.3} parent=31 // pred_check
          %p172 = pneg %p79
        $region38: #{cnn_decoder.3} parent=31 // pred_check_branch
          %174 = sbr.rel (%p172) target = $region40
        $region39: #{cnn_decoder.3} parent=31 // pred_region
          %176 = dma.done [#allocation5], 32
        $region40: #{cnn_decoder.3} parent=31 // pred_fallthru
          _
        %s177 = smul.u32 11, %s16
        %p178 = scmp.lt.s32.totalorder %s177, 21
        %s179 = scalar_select %p178, %s177, 21
        %s180 = smul.addr %s179, 2
        %s181 = smul.addr %s180, 4
        %s182 = scalar_lea.vmem %s0, %s181
        %p183 = pneg %p37
        %p184 = pneg %p34
        %p185 = pneg %p58
        %p186 = pneg %p55
        %p187 = pneg %p79
        %p188 = pneg %p76
        %p189 = pneg %p105
        %p190 = pneg %p102
        %s191 = smul.u32 11, %s16
        %p192 = scmp.lt.s32.totalorder %s191, 21
        %s193 = scalar_select %p192, %s191, 21
        %s194 = smul.addr %s193, 2
        %s195 = smul.addr %s194, 4
        %s196 = scalar_lea.vmem %s3, %s195
        %s197 = smul.u32 11, %s16
        %p198 = scmp.lt.s32.totalorder %s197, 21
        %s199 = scalar_select %p198, %s197, 21
        %s200 = smul.addr %s199, 2
        %s201 = smul.addr %s200, 4
        %s202 = scalar_lea.vmem %s0, %s201
        %s203 = smul.u32 11, %s16
        %s204 = smul.u32 11, %s16
        %p205 = scmp.lt.s32.totalorder %s204, 21
        %s206 = scalar_select %p205, %s204, 21
        %s207 = smul.addr %s206, 2
        %s208 = smul.addr %s207, 4
        %s209 = scalar_lea.vmem %s3, %s208
        %s210 = smul.u32 11, %s16
        %v211 = vld [vmem:[%s202] sm:$0xff]
        %v212 = vld [vmem:[%s202 + $0x8] sm:$0xff]
        %v213 = vld [vmem:[%s202 + $0x10] sm:$0xff]
        %v214 = vld [vmem:[%s202 + $0x18] sm:$0xff]
        %v215 = vld [vmem:[%s202 + $0x20] sm:$0xff]
        %v216 = vld [vmem:[%s202 + $0x28] sm:$0xff]
        %v217 = vld [vmem:[%s202 + $0x30] sm:$0xff]
        %v218 = vld [vmem:[%s202 + $0x38] sm:$0xff]
        %v219 = vld [vmem:[%s202 + $0x40] sm:$0xff]
        %v220 = vld [vmem:[%s202 + $0x48] sm:$0xff]
        %v221 = vld [vmem:[%s202 + $0x50] sm:$0xff]
        %v222 = vld [vmem:[#allocation2] sm:$0xff]
        %v223 = vld [vmem:[#allocation2 + $0x8] sm:$0xff]
        %v224 = vld [vmem:[#allocation2 + $0x10] sm:$0xff]
        %v225 = vld [vmem:[#allocation2 + $0x18] sm:$0xff]
        %v226 = vld [vmem:[#allocation2 + $0x20] sm:$0xff]
        %v227 = vld [vmem:[#allocation2 + $0x28] sm:$0xff]
        %v228 = vld [vmem:[#allocation2 + $0x30] sm:$0xff]
        %v229 = vld [vmem:[#allocation2 + $0x38] sm:$0xff]
        %v230 = vld [vmem:[#allocation2 + $0x40] sm:$0xff]
        %v231 = vld [vmem:[#allocation2 + $0x48] sm:$0xff]
        %v232 = vld [vmem:[#allocation2 + $0x50] sm:$0xff]
        %v233 = vld [vmem:[#allocation2 + $0x58] sm:$0xff]
        %v234 = vld [vmem:[#allocation2 + $0x60] sm:$0xff]
        %v235 = vld [vmem:[#allocation2 + $0x68] sm:$0xff]
        %v236 = vld [vmem:[#allocation2 + $0x70] sm:$0xff]
        %v237 = vld [vmem:[#allocation2 + $0x78] sm:$0xff]
        %v238 = vld [vmem:[#allocation2 + $0x80] sm:$0xff]
        %v239 = vld [vmem:[#allocation2 + $0x88] sm:$0xff]
        %v240 = vld [vmem:[#allocation2 + $0x90] sm:$0xff]
        %v241 = vld [vmem:[#allocation2 + $0x98] sm:$0xff]
        %v242 = vld [vmem:[#allocation2 + $0xa0] sm:$0xff]
        %v243 = vld [vmem:[#allocation2 + $0xa8] sm:$0xff]
        %v244 = vld [vmem:[#allocation2 + $0xb0] sm:$0xff]
        %v245 = vld [vmem:[#allocation2 + $0xb8] sm:$0xff]
        %v246 = vld [vmem:[#allocation2 + $0xc0] sm:$0xff]
        %v247 = vld [vmem:[#allocation2 + $0xc8] sm:$0xff]
        %v248 = vld [vmem:[#allocation2 + $0xd0] sm:$0xff]
        %v249 = vld [vmem:[#allocation2 + $0xd8] sm:$0xff]
        %v250 = vld [vmem:[#allocation2 + $0xe0] sm:$0xff]
        %v251 = vld [vmem:[#allocation2 + $0xe8] sm:$0xff]
        %v252 = vld [vmem:[#allocation2 + $0xf0] sm:$0xff]
        %v253 = vld [vmem:[#allocation2 + $0xf8] sm:$0xff]
        %v254 = vld [vmem:[#allocation4] sm:$0x3]
        %v256 = vperm.slane %v254, 0
        %v257 = vperm.slane %v254, 1
        %v271 = vunpack.c.l.b16 %v211
        %v272 = vunpack.c.h.b16 %v211
        %v273 = vunpack.c.l.b16 %v212
        %v274 = vunpack.c.h.b16 %v212
        %v275 = vunpack.c.l.b16 %v213
        %v276 = vunpack.c.h.b16 %v213
        %v277 = vunpack.c.l.b16 %v214
        %v278 = vunpack.c.h.b16 %v214
        %v279 = vunpack.c.l.b16 %v215
        %v280 = vunpack.c.h.b16 %v215
        %v281 = vunpack.c.l.b16 %v216
        %v282 = vunpack.c.h.b16 %v216
        %v283 = vunpack.c.l.b16 %v217
        %v284 = vunpack.c.h.b16 %v217
        %v285 = vunpack.c.l.b16 %v218
        %v286 = vunpack.c.h.b16 %v218
        %v287 = vunpack.c.l.b16 %v219
        %v288 = vunpack.c.h.b16 %v219
        %v289 = vunpack.c.l.b16 %v220
        %v290 = vunpack.c.h.b16 %v220
        %v291 = vunpack.c.l.b16 %v221
        %v292 = vunpack.c.h.b16 %v221
        %v293 = vpack.c.b16 %v273, %v271
        %v294 = vpack.c.b16 %v274, %v272
        %v295 = vpack.c.b16 %v277, %v275
        %v296 = vpack.c.b16 %v278, %v276
        %v297 = vpack.c.b16 %v281, %v279
        %v298 = vpack.c.b16 %v282, %v280
        %v299 = vpack.c.b16 %v285, %v283
        %v300 = vpack.c.b16 %v286, %v284
        %v301 = vpack.c.b16 %v289, %v287
        %v302 = vpack.c.b16 %v290, %v288
        %v303 = vpack.c.b16 %v291, %v291
        %v304 = vpack.c.b16 %v292, %v292
        %v349 = vunpack.c.l.b16 %v222
        %v350 = vunpack.c.h.b16 %v222
        %v351 = vunpack.c.l.b16 %v223
        %v352 = vunpack.c.h.b16 %v223
        %v353 = vunpack.c.l.b16 %v224
        %v354 = vunpack.c.h.b16 %v224
        %v355 = vunpack.c.l.b16 %v225
        %v356 = vunpack.c.h.b16 %v225
        %v357 = vunpack.c.l.b16 %v226
        %v358 = vunpack.c.h.b16 %v226
        %v359 = vunpack.c.l.b16 %v227
        %v360 = vunpack.c.h.b16 %v227
        %v361 = vunpack.c.l.b16 %v228
        %v362 = vunpack.c.h.b16 %v228
        %v363 = vunpack.c.l.b16 %v229
        %v364 = vunpack.c.h.b16 %v229
        %v365 = vunpack.c.l.b16 %v230
        %v366 = vunpack.c.h.b16 %v230
        %v367 = vunpack.c.l.b16 %v231
        %v368 = vunpack.c.h.b16 %v231
        %v369 = vunpack.c.l.b16 %v232
        %v370 = vunpack.c.h.b16 %v232
        %v371 = vunpack.c.l.b16 %v233
        %v372 = vunpack.c.h.b16 %v233
        %v373 = vunpack.c.l.b16 %v234
        %v374 = vunpack.c.h.b16 %v234
        %v375 = vunpack.c.l.b16 %v235
        %v376 = vunpack.c.h.b16 %v235
        %v377 = vunpack.c.l.b16 %v236
        %v378 = vunpack.c.h.b16 %v236
        %v379 = vunpack.c.l.b16 %v237
        %v380 = vunpack.c.h.b16 %v237
        %v381 = vunpack.c.l.b16 %v238
        %v382 = vunpack.c.h.b16 %v238
        %v383 = vunpack.c.l.b16 %v239
        %v384 = vunpack.c.h.b16 %v239
        %v385 = vunpack.c.l.b16 %v240
        %v386 = vunpack.c.h.b16 %v240
        %v387 = vunpack.c.l.b16 %v241
        %v388 = vunpack.c.h.b16 %v241
        %v389 = vunpack.c.l.b16 %v242
        %v390 = vunpack.c.h.b16 %v242
        %v391 = vunpack.c.l.b16 %v243
        %v392 = vunpack.c.h.b16 %v243
        %v393 = vunpack.c.l.b16 %v244
        %v394 = vunpack.c.h.b16 %v244
        %v395 = vunpack.c.l.b16 %v245
        %v396 = vunpack.c.h.b16 %v245
        %v397 = vunpack.c.l.b16 %v246
        %v398 = vunpack.c.h.b16 %v246
        %v399 = vunpack.c.l.b16 %v247
        %v400 = vunpack.c.h.b16 %v247
        %v401 = vunpack.c.l.b16 %v248
        %v402 = vunpack.c.h.b16 %v248
        %v403 = vunpack.c.l.b16 %v249
        %v404 = vunpack.c.h.b16 %v249
        %v405 = vunpack.c.l.b16 %v250
        %v406 = vunpack.c.h.b16 %v250
        %v407 = vunpack.c.l.b16 %v251
        %v408 = vunpack.c.h.b16 %v251
        %v409 = vunpack.c.l.b16 %v252
        %v410 = vunpack.c.h.b16 %v252
        %v411 = vunpack.c.l.b16 %v253
        %v412 = vunpack.c.h.b16 %v253
        %v413 = vpack.c.b16 %v351, %v349
        %v414 = vpack.c.b16 %v352, %v350
        %v415 = vpack.c.b16 %v355, %v353
        %v416 = vpack.c.b16 %v356, %v354
        %v417 = vpack.c.b16 %v359, %v357
        %v418 = vpack.c.b16 %v360, %v358
        %v419 = vpack.c.b16 %v363, %v361
        %v420 = vpack.c.b16 %v364, %v362
        %v421 = vpack.c.b16 %v367, %v365
        %v422 = vpack.c.b16 %v368, %v366
        %v423 = vpack.c.b16 %v371, %v369
        %v424 = vpack.c.b16 %v372, %v370
        %v425 = vpack.c.b16 %v375, %v373
        %v426 = vpack.c.b16 %v376, %v374
        %v427 = vpack.c.b16 %v379, %v377
        %v428 = vpack.c.b16 %v380, %v378
        %v429 = vpack.c.b16 %v383, %v381
        %v430 = vpack.c.b16 %v384, %v382
        %v431 = vpack.c.b16 %v387, %v385
        %v432 = vpack.c.b16 %v388, %v386
        %v433 = vpack.c.b16 %v391, %v389
        %v434 = vpack.c.b16 %v392, %v390
        %v435 = vpack.c.b16 %v395, %v393
        %v436 = vpack.c.b16 %v396, %v394
        %v437 = vpack.c.b16 %v399, %v397
        %v438 = vpack.c.b16 %v400, %v398
        %v439 = vpack.c.b16 %v403, %v401
        %v440 = vpack.c.b16 %v404, %v402
        %v441 = vpack.c.b16 %v407, %v405
        %v442 = vpack.c.b16 %v408, %v406
        %v443 = vpack.c.b16 %v411, %v409
        %v444 = vpack.c.b16 %v412, %v410
        %477 = vmatpush.bf16.msra.mxu0 %v427
        %478 = vmatpush.bf16.msra.mxu0 %v425
        %479 = vmatpush.bf16.msra.mxu0 %v423
        %480 = vmatpush.bf16.msra.mxu0 %v421
        %481 = vmatpush.bf16.msra.mxu0 %v419
        %482 = vmatpush.bf16.msra.mxu0 %v417
        %483 = vmatpush.bf16.msra.mxu0 %v415
        %484 = vmatpush.bf16.msra.mxu0 %v413
        %485 = vmatmul.bf16.gmra.mxu0 %v293
        %v486 = vpop.f32.mrf.mxu0
        %v487 = vadd.f32 %v256, %v486
        %v488 = vpop.f32.mrf.mxu0
        %v489 = vadd.f32 %v256, %v488
        %490 = vmatmul.bf16.gmra.mxu0 %v295
        %v491 = vpop.f32.mrf.mxu0
        %v492 = vadd.f32 %v256, %v491
        %v493 = vpop.f32.mrf.mxu0
        %v494 = vadd.f32 %v256, %v493
        %495 = vmatmul.bf16.gmra.mxu0 %v297
        %v496 = vpop.f32.mrf.mxu0
        %v497 = vadd.f32 %v256, %v496
        %v498 = vpop.f32.mrf.mxu0
        %v499 = vadd.f32 %v256, %v498
        %500 = vmatmul.bf16.gmra.mxu0 %v299
        %v501 = vpop.f32.mrf.mxu0
        %v502 = vadd.f32 %v256, %v501
        %v503 = vpop.f32.mrf.mxu0
        %v504 = vadd.f32 %v256, %v503
        %505 = vmatmul.bf16.gmra.mxu0 %v301
        %v506 = vpop.f32.mrf.mxu0
        %v507 = vadd.f32 %v256, %v506
        %v508 = vpop.f32.mrf.mxu0
        %v509 = vadd.f32 %v256, %v508
        %510 = vmatmul.bf16.gmra.mxu0 %v303
        %v511 = vpop.f32.mrf.mxu0
        %v512 = vadd.f32 %v256, %v511
        %v513 = vpop.f32.mrf.mxu0
        %514 = vdwg.mxu0
        %515 = vmatpush.bf16.msra.mxu0 %v443
        %516 = vmatpush.bf16.msra.mxu0 %v441
        %517 = vmatpush.bf16.msra.mxu0 %v439
        %518 = vmatpush.bf16.msra.mxu0 %v437
        %519 = vmatpush.bf16.msra.mxu0 %v435
        %520 = vmatpush.bf16.msra.mxu0 %v433
        %521 = vmatpush.bf16.msra.mxu0 %v431
        %522 = vmatpush.bf16.msra.mxu0 %v429
        %523 = vmatmul.bf16.gmra.mxu0 %v294
        %v524 = vpop.f32.mrf.mxu0
        %v525 = vadd.f32 %v487, %v524
        %v526 = vpop.f32.mrf.mxu0
        %v527 = vadd.f32 %v489, %v526
        %528 = vmatmul.bf16.gmra.mxu0 %v296
        %v529 = vpop.f32.mrf.mxu0
        %v530 = vadd.f32 %v492, %v529
        %v531 = vpop.f32.mrf.mxu0
        %v532 = vadd.f32 %v494, %v531
        %533 = vmatmul.bf16.gmra.mxu0 %v298
        %v534 = vpop.f32.mrf.mxu0
        %v535 = vadd.f32 %v497, %v534
        %v536 = vpop.f32.mrf.mxu0
        %v537 = vadd.f32 %v499, %v536
        %538 = vmatmul.bf16.gmra.mxu0 %v300
        %v539 = vpop.f32.mrf.mxu0
        %v540 = vadd.f32 %v502, %v539
        %v541 = vpop.f32.mrf.mxu0
        %v542 = vadd.f32 %v504, %v541
        %543 = vmatmul.bf16.gmra.mxu0 %v302
        %v544 = vpop.f32.mrf.mxu0
        %v545 = vadd.f32 %v507, %v544
        %v546 = vpop.f32.mrf.mxu0
        %v547 = vadd.f32 %v509, %v546
        %548 = vmatmul.bf16.gmra.mxu0 %v304
        %v549 = vpop.f32.mrf.mxu0
        %v550 = vadd.f32 %v512, %v549
        %v551 = vpop.f32.mrf.mxu0
        %552 = vdwg.mxu0
        %553 = vmatpush.bf16.msra.mxu0 %v428
        %554 = vmatpush.bf16.msra.mxu0 %v426
        %555 = vmatpush.bf16.msra.mxu0 %v424
        %556 = vmatpush.bf16.msra.mxu0 %v422
        %557 = vmatpush.bf16.msra.mxu0 %v420
        %558 = vmatpush.bf16.msra.mxu0 %v418
        %559 = vmatpush.bf16.msra.mxu0 %v416
        %560 = vmatpush.bf16.msra.mxu0 %v414
        %561 = vmatmul.bf16.gmra.mxu0 %v293
        %v562 = vpop.f32.mrf.mxu0
        %v563 = vadd.f32 %v257, %v562
        %v564 = vpop.f32.mrf.mxu0
        %v565 = vadd.f32 %v257, %v564
        %566 = vmatmul.bf16.gmra.mxu0 %v295
        %v567 = vpop.f32.mrf.mxu0
        %v568 = vadd.f32 %v257, %v567
        %v569 = vpop.f32.mrf.mxu0
        %v570 = vadd.f32 %v257, %v569
        %571 = vmatmul.bf16.gmra.mxu0 %v297
        %v572 = vpop.f32.mrf.mxu0
        %v573 = vadd.f32 %v257, %v572
        %v574 = vpop.f32.mrf.mxu0
        %v575 = vadd.f32 %v257, %v574
        %576 = vmatmul.bf16.gmra.mxu0 %v299
        %v577 = vpop.f32.mrf.mxu0
        %v578 = vadd.f32 %v257, %v577
        %v579 = vpop.f32.mrf.mxu0
        %v580 = vadd.f32 %v257, %v579
        %581 = vmatmul.bf16.gmra.mxu0 %v301
        %v582 = vpop.f32.mrf.mxu0
        %v583 = vadd.f32 %v257, %v582
        %v584 = vpop.f32.mrf.mxu0
        %v585 = vadd.f32 %v257, %v584
        %586 = vmatmul.bf16.gmra.mxu0 %v303
        %v587 = vpop.f32.mrf.mxu0
        %v588 = vadd.f32 %v257, %v587
        %v589 = vpop.f32.mrf.mxu0
        %590 = vdwg.mxu0
        %591 = vmatpush.bf16.msra.mxu0 %v444
        %592 = vmatpush.bf16.msra.mxu0 %v442
        %593 = vmatpush.bf16.msra.mxu0 %v440
        %594 = vmatpush.bf16.msra.mxu0 %v438
        %595 = vmatpush.bf16.msra.mxu0 %v436
        %596 = vmatpush.bf16.msra.mxu0 %v434
        %597 = vmatpush.bf16.msra.mxu0 %v432
        %598 = vmatpush.bf16.msra.mxu0 %v430
        %599 = vmatmul.bf16.gmra.mxu0 %v294
        %v600 = vpop.f32.mrf.mxu0
        %v601 = vadd.f32 %v563, %v600
        %v602 = vpop.f32.mrf.mxu0
        %v603 = vadd.f32 %v565, %v602
        %604 = vmatmul.bf16.gmra.mxu0 %v296
        %v605 = vpop.f32.mrf.mxu0
        %v606 = vadd.f32 %v568, %v605
        %v607 = vpop.f32.mrf.mxu0
        %v608 = vadd.f32 %v570, %v607
        %609 = vmatmul.bf16.gmra.mxu0 %v298
        %v610 = vpop.f32.mrf.mxu0
        %v611 = vadd.f32 %v573, %v610
        %v612 = vpop.f32.mrf.mxu0
        %v613 = vadd.f32 %v575, %v612
        %614 = vmatmul.bf16.gmra.mxu0 %v300
        %v615 = vpop.f32.mrf.mxu0
        %v616 = vadd.f32 %v578, %v615
        %v617 = vpop.f32.mrf.mxu0
        %v618 = vadd.f32 %v580, %v617
        %619 = vmatmul.bf16.gmra.mxu0 %v302
        %v620 = vpop.f32.mrf.mxu0
        %v621 = vadd.f32 %v583, %v620
        %v622 = vpop.f32.mrf.mxu0
        %v623 = vadd.f32 %v585, %v622
        %624 = vmatmul.bf16.gmra.mxu0 %v304
        %v625 = vpop.f32.mrf.mxu0
        %v626 = vadd.f32 %v588, %v625
        %v627 = vpop.f32.mrf.mxu0
        %628 = vdwg.mxu0
        %v629 = vmax.f32 %v525, 0.0
        %v630 = vmax.f32 %v601, 0.0
        %v631 = vmax.f32 %v527, 0.0
        %v632 = vmax.f32 %v603, 0.0
        %v633 = vmax.f32 %v530, 0.0
        %v634 = vmax.f32 %v606, 0.0
        %v635 = vmax.f32 %v532, 0.0
        %v636 = vmax.f32 %v608, 0.0
        %v637 = vmax.f32 %v535, 0.0
        %v638 = vmax.f32 %v611, 0.0
        %v639 = vmax.f32 %v537, 0.0
        %v640 = vmax.f32 %v613, 0.0
        %v641 = vmax.f32 %v540, 0.0
        %v642 = vmax.f32 %v616, 0.0
        %v643 = vmax.f32 %v542, 0.0
        %v644 = vmax.f32 %v618, 0.0
        %v645 = vmax.f32 %v545, 0.0
        %v646 = vmax.f32 %v621, 0.0
        %v647 = vmax.f32 %v547, 0.0
        %v648 = vmax.f32 %v623, 0.0
        %v649 = vmax.f32 %v550, 0.0
        %v650 = vmax.f32 %v626, 0.0
        %v651 = vpack.c.bf16 %v630, %v629
        %v652 = vpack.c.bf16 %v632, %v631
        %v653 = vpack.c.bf16 %v634, %v633
        %v654 = vpack.c.bf16 %v636, %v635
        %v655 = vpack.c.bf16 %v638, %v637
        %v656 = vpack.c.bf16 %v640, %v639
        %v657 = vpack.c.bf16 %v642, %v641
        %v658 = vpack.c.bf16 %v644, %v643
        %v659 = vpack.c.bf16 %v646, %v645
        %v660 = vpack.c.bf16 %v648, %v647
        %v661 = vpack.c.bf16 %v650, %v649
        %662 = vst [vmem:[%s209] sm:$0xff] %v651
        %663 = vst [vmem:[%s209 + $0x8] sm:$0xff] %v652
        %664 = vst [vmem:[%s209 + $0x10] sm:$0xff] %v653
        %665 = vst [vmem:[%s209 + $0x18] sm:$0xff] %v654
        %666 = vst [vmem:[%s209 + $0x20] sm:$0xff] %v655
        %667 = vst [vmem:[%s209 + $0x28] sm:$0xff] %v656
        %668 = vst [vmem:[%s209 + $0x30] sm:$0xff] %v657
        %669 = vst [vmem:[%s209 + $0x38] sm:$0xff] %v658
        %670 = vst [vmem:[%s209 + $0x40] sm:$0xff] %v659
        %671 = vst [vmem:[%s209 + $0x48] sm:$0xff] %v660
        %672 = vst [vmem:[%s209 + $0x50] sm:$0xff] %v661
        %s673 = smul.u32 11, %s16
        %p674 = scmp.lt.s32.totalorder %s673, 21
        %s675 = scalar_select %p674, %s673, 21
        %s676 = smul.addr %s675, 2
        %s677 = smul.addr %s676, 4
        %s678 = scalar_lea.vmem %s3, %s677
        // Predicated region
        $region41: #{cnn_decoder.3} parent=31 // pred_check
          %p679 = pneg %p102
        $region42: #{cnn_decoder.3} parent=31 // pred_check_branch
          %681 = sbr.rel (%p679) target = $region44
        $region43: #{cnn_decoder.3} parent=31 // pred_region
          %s682 = smul.u32 11, %s16
        $region44: #{cnn_decoder.3} parent=31 // pred_fallthru
          _
      $region32: #{cnn_decoder.3} parent=5 // pred_fallthru
        _
      %p683 = scmp.le.s32.totalorder 2, %s11
      // Predicated region
      $region45: #{cnn_decoder.3} parent=5 // pred_check
        %p684 = pneg %p683
      $region46: #{cnn_decoder.3} parent=5 // pred_check_branch
        %686 = sbr.rel (%p684) target = $region48
      $region47: #{cnn_decoder.3} parent=5 // pred_region
        %s687 = ssub.s32 %s11, 2
        // Predicated region
        $region49: #{cnn_decoder.3} parent=47 // pred_check
          %p688 = pneg %p108
        $region50: #{cnn_decoder.3} parent=47 // pred_check_branch
          %690 = sbr.rel (%p688) target = $region52
        $region51: #{cnn_decoder.3} parent=47 // pred_region
          %s691 = smul.u32 11, %s17
          %p692 = scmp.lt.s32.totalorder %s691, 21
          %s693 = scalar_select %p692, %s691, 21
          %s694 = smul.addr %s693, 2
          %s695 = smul.addr %s694, 4
          %s696 = scalar_lea.vmem %s3, %s695
        $region52: #{cnn_decoder.3} parent=47 // pred_fallthru
          _
      $region48: #{cnn_decoder.3} parent=5 // pred_fallthru
        _
    $region6: #{cnn_decoder.3} parent=1 // loop_footer
      %s15 = sadd.s32 1, %s11
    $region7: #{cnn_decoder.3} parent=1 // loop_footer_branch
      %10 = sbr.rel target = $region3
    $region8: #{cnn_decoder.3} parent=1 // loop_exit
      _
    %697 = vsyncpa [#allocation3], 1
    %s698 = scalar_lea.sflag [#allocation3], 1
    %699 = vsyncpa %s698, 1
    %700 = vsyncpa [#allocation5], 1

// kernel: cnn_decoder.4
$region0: #{cnn_decoder.4}
  #allocation0 [shape = 'u32[]', space=smem, size = 0x4, offset = 0x4, fixed_abs, tag = 'smem constant byte address 0x4 - core index']
  #allocation1 [shape = 'u32[72,128]{1,0:T(1,128)}', space=vmem, size = 0x9000, scoped, tag = 'internal scratch']
  %s0 = inlined_call_operand.vmem [shape: bf16[592,256], index: 0, kind: input, shape index: {}]
  %s1 = inlined_call_operand.vmem [shape: bf16[256,128], index: 1, kind: input, shape index: {}]
  %s2 = inlined_call_operand.vmem [shape: f32[1,128], index: 2, kind: input, shape index: {}]
  %s3 = inlined_call_operand.vmem [shape: bf16[592,128], index: 3, kind: output, shape index: {}]
  %s4 = sld [smem:[#allocation0]]
  $region45: #{cnn_decoder.4} parent=0
    _
  %s6 = ssub.s32 1, %s4
  %s7 = scalar_select 0, %s6, %s4
  loop: start=0, step=1, limit=4
  $region2: #{cnn_decoder.4} parent=0 // loop_pre_header
    _
  $region3: #{cnn_decoder.4} parent=0 // loop_header
    %s9 = sphi 0, %s13
    %p10 = scmp.ge.s32.totalorder %s9, 4
    %s19 = sphi 0, %s21
    %s22 = sphi 0, %s19
    %s23 = sphi 0, %s22
    %s39 = sphi 0, %s23
    %s43 = sphi 0, %s43
    %s45 = sphi 0, %s43
    %s46 = sphi 0, %s45
    %s60 = sphi 0, %s46
    %s64 = sphi 0, %s64
    %s66 = sphi 0, %s64
    %s67 = sphi 0, %s66
    %s81 = sphi 0, %s67
    %s87 = sphi 0, %s89
    %s90 = sphi 0, %s87
    %s91 = sphi 0, %s90
    %s107 = sphi 0, %s91
  $region4: #{cnn_decoder.4} parent=0 // loop_header_branch
    %12 = sbr.rel (%p10) target = $region8
  $region5: #{cnn_decoder.4} parent=0 // loop_body
    %s14 = ssub.s32 %s9, 1
    %s15 = ssub.s32 %s9, 2
    %s16 = sadd.s32 %s9, 1
    %s17 = ssub.s32 %s9, %s16
    %p18 = scmp.eq.s32.totalorder %s17, 0
    %s20 = sadd.s32 %s19, 1
    %s21 = scalar_select %p18, %s19, %s20
    %p24 = pneg %p18
    %p25 = scmp.eq.s32.totalorder %s9, 1
    %p26 = por %p24, %p25
    %p27 = scmp.ne.s32.totalorder %s19, %s22
    %p28 = scmp.eq.s32.totalorder %s9, 0
    %p29 = por %p27, %p28
    %p30 = scmp.ne.s32.totalorder %s19, %s22
    %p31 = scmp.eq.s32.totalorder %s14, 1
    %p32 = por %p30, %p31
    %p33 = scmp.ne.s32.totalorder %s22, %s23
    %p34 = scmp.eq.s32.totalorder %s14, 0
    %p35 = por %p33, %p34
    %p36 = scmp.ne.s32.totalorder %s22, %s23
    %p37 = scmp.eq.s32.totalorder %s15, 1
    %p38 = por %p36, %p37
    %p40 = scmp.ne.s32.totalorder %s23, %s39
    %p41 = scmp.eq.s32.totalorder %s15, 0
    %p42 = por %p40, %p41
    %s44 = sadd.s32 %s43, 1
    %p47 = scmp.eq.s32.totalorder %s9, 1
    %p48 = scmp.ne.s32.totalorder %s43, %s45
    %p49 = scmp.eq.s32.totalorder %s9, 0
    %p50 = por %p48, %p49
    %p51 = scmp.ne.s32.totalorder %s43, %s45
    %p52 = scmp.eq.s32.totalorder %s14, 1
    %p53 = por %p51, %p52
    %p54 = scmp.ne.s32.totalorder %s45, %s46
    %p55 = scmp.eq.s32.totalorder %s14, 0
    %p56 = por %p54, %p55
    %p57 = scmp.ne.s32.totalorder %s45, %s46
    %p58 = scmp.eq.s32.totalorder %s15, 1
    %p59 = por %p57, %p58
    %p61 = scmp.ne.s32.totalorder %s46, %s60
    %p62 = scmp.eq.s32.totalorder %s15, 0
    %p63 = por %p61, %p62
    %s65 = sadd.s32 %s64, 1
    %p68 = scmp.eq.s32.totalorder %s9, 1
    %p69 = scmp.ne.s32.totalorder %s64, %s66
    %p70 = scmp.eq.s32.totalorder %s9, 0
    %p71 = por %p69, %p70
    %p72 = scmp.ne.s32.totalorder %s64, %s66
    %p73 = scmp.eq.s32.totalorder %s14, 1
    %p74 = por %p72, %p73
    %p75 = scmp.ne.s32.totalorder %s66, %s67
    %p76 = scmp.eq.s32.totalorder %s14, 0
    %p77 = por %p75, %p76
    %p78 = scmp.ne.s32.totalorder %s66, %s67
    %p79 = scmp.eq.s32.totalorder %s15, 1
    %p80 = por %p78, %p79
    %p82 = scmp.ne.s32.totalorder %s67, %s81
    %p83 = scmp.eq.s32.totalorder %s15, 0
    %p84 = por %p82, %p83
    %s85 = ssub.s32 %s9, %s16
    %p86 = scmp.eq.s32.totalorder %s85, 0
    %s88 = sadd.s32 %s87, 1
    %s89 = scalar_select %p86, %s87, %s88
    %p92 = pneg %p86
    %p93 = scmp.eq.s32.totalorder %s9, 1
    %p94 = por %p92, %p93
    %p95 = scmp.ne.s32.totalorder %s87, %s90
    %p96 = scmp.eq.s32.totalorder %s9, 0
    %p97 = por %p95, %p96
    %p98 = scmp.ne.s32.totalorder %s87, %s90
    %p99 = scmp.eq.s32.totalorder %s14, 1
    %p100 = por %p98, %p99
    %p101 = scmp.ne.s32.totalorder %s90, %s91
    %p102 = scmp.eq.s32.totalorder %s14, 0
    %p103 = por %p101, %p102
    %p104 = scmp.ne.s32.totalorder %s90, %s91
    %p105 = scmp.eq.s32.totalorder %s15, 1
    %p106 = por %p104, %p105
    %p108 = scmp.ne.s32.totalorder %s91, %s107
    %p109 = scmp.eq.s32.totalorder %s15, 0
    %p110 = por %p108, %p109
    %p111 = scmp.le.s32.totalorder 1, %s9
    %p112 = scmp.lt.s32.totalorder %s9, 3
    %p113 = pnand %p111, %p112
    %p114 = pneg %p113
    // Predicated region
    $region9: #{cnn_decoder.4} parent=5 // pred_check
      _
    $region10: #{cnn_decoder.4} parent=5 // pred_check_branch
      %116 = sbr.rel (%p113) target = $region12
    $region11: #{cnn_decoder.4} parent=5 // pred_region
      %s117 = ssub.s32 %s9, 1
      // Predicated region
      $region13: #{cnn_decoder.4} parent=11 // pred_check
        %p118 = pneg %p56
      $region14: #{cnn_decoder.4} parent=11 // pred_check_branch
        %120 = sbr.rel (%p118) target = $region16
      $region15: #{cnn_decoder.4} parent=11 // pred_region
        _
      $region16: #{cnn_decoder.4} parent=11 // pred_fallthru
        _
      // Predicated region
      $region17: #{cnn_decoder.4} parent=11 // pred_check
        %p121 = pneg %p77
      $region18: #{cnn_decoder.4} parent=11 // pred_check_branch
        %123 = sbr.rel (%p121) target = $region20
      $region19: #{cnn_decoder.4} parent=11 // pred_region
        _
      $region20: #{cnn_decoder.4} parent=11 // pred_fallthru
        _
    $region12: #{cnn_decoder.4} parent=5 // pred_fallthru
      _
    %p124 = scmp.lt.s32.totalorder %s9, 2
    // Predicated region
    $region21: #{cnn_decoder.4} parent=5 // pred_check
      %p125 = pneg %p124
    $region22: #{cnn_decoder.4} parent=5 // pred_check_branch
      %127 = sbr.rel (%p125) target = $region24
    $region23: #{cnn_decoder.4} parent=5 // pred_region
      // Predicated region
      $region25: #{cnn_decoder.4} parent=23 // pred_check
        %p128 = pneg %p29
      $region26: #{cnn_decoder.4} parent=23 // pred_check_branch
        %130 = sbr.rel (%p128) target = $region28
      $region27: #{cnn_decoder.4} parent=23 // pred_region
        %s131 = smul.u32 37, %s9
        %p132 = scmp.lt.s32.totalorder %s131, 73
        %s133 = scalar_select %p132, %s131, 73
        %s134 = smul.addr %s133, 2
        %s135 = smul.addr %s134, 4
        %s136 = scalar_lea.vmem %s0, %s135
        %s137 = smul.u32 37, %s9
      $region28: #{cnn_decoder.4} parent=23 // pred_fallthru
        _
    $region24: #{cnn_decoder.4} parent=5 // pred_fallthru
      _
    %p138 = scmp.le.s32.totalorder 1, %s9
    %p139 = scmp.lt.s32.totalorder %s9, 3
    %p140 = pnand %p138, %p139
    %p141 = pneg %p140
    // Predicated region
    $region29: #{cnn_decoder.4} parent=5 // pred_check
      _
    $region30: #{cnn_decoder.4} parent=5 // pred_check_branch
      %143 = sbr.rel (%p140) target = $region32
    $region31: #{cnn_decoder.4} parent=5 // pred_region
      %s144 = ssub.s32 %s9, 1
      %s145 = smul.u32 37, %s14
      %p146 = scmp.lt.s32.totalorder %s145, 73
      %s147 = scalar_select %p146, %s145, 73
      %s148 = smul.addr %s147, 2
      %s149 = smul.addr %s148, 4
      %s150 = scalar_lea.vmem %s0, %s149
      %p151 = pneg %p35
      %p152 = pneg %p32
      %p153 = pneg %p56
      %p154 = pneg %p53
      %p155 = pneg %p77
      %p156 = pneg %p74
      %p157 = pneg %p103
      %p158 = pneg %p100
      %s159 = smul.u32 37, %s14
      %p160 = scmp.lt.s32.totalorder %s159, 73
      %s161 = scalar_select %p160, %s159, 73
      %s162 = smul.addr %s161, 4
      %s163 = scalar_lea.vmem %s3, %s162
      %s164 = smul.u32 37, %s14
      %p165 = scmp.lt.s32.totalorder %s164, 73
      %s166 = scalar_select %p165, %s164, 73
      %s167 = smul.addr %s166, 2
      %s168 = smul.addr %s167, 4
      %s169 = scalar_lea.vmem %s0, %s168
      %s170 = smul.u32 37, %s14
      %s171 = smul.u32 37, %s14
      %p172 = scmp.lt.s32.totalorder %s171, 73
      %s173 = scalar_select %p172, %s171, 73
      %s174 = smul.addr %s173, 4
      %s175 = scalar_lea.vmem %s3, %s174
      %s176 = smul.u32 37, %s14
      %v177 = vld [vmem:[%s169] sm:$0xff]
      %v178 = vld [vmem:[%s169 + $0x8] sm:$0xff]
      %v179 = vld [vmem:[%s169 + $0x10] sm:$0xff]
      %v180 = vld [vmem:[%s169 + $0x18] sm:$0xff]
      %v181 = vld [vmem:[%s169 + $0x20] sm:$0xff]
      %v182 = vld [vmem:[%s169 + $0x28] sm:$0xff]
      %v183 = vld [vmem:[%s169 + $0x30] sm:$0xff]
      %v184 = vld [vmem:[%s169 + $0x38] sm:$0xff]
      %v185 = vld [vmem:[%s169 + $0x40] sm:$0xff]
      %v186 = vld [vmem:[%s169 + $0x48] sm:$0xff]
      %v187 = vld [vmem:[%s169 + $0x50] sm:$0xff]
      %v188 = vld [vmem:[%s169 + $0x58] sm:$0xff]
      %v189 = vld [vmem:[%s169 + $0x60] sm:$0xff]
      %v190 = vld [vmem:[%s169 + $0x68] sm:$0xff]
      %v191 = vld [vmem:[%s169 + $0x70] sm:$0xff]
      %v192 = vld [vmem:[%s169 + $0x78] sm:$0xff]
      %v193 = vld [vmem:[%s169 + $0x80] sm:$0xff]
      %v194 = vld [vmem:[%s169 + $0x88] sm:$0xff]
      %v195 = vld [vmem:[%s169 + $0x90] sm:$0xff]
      %v196 = vld [vmem:[%s169 + $0x98] sm:$0xff]
      %v197 = vld [vmem:[%s169 + $0xa0] sm:$0xff]
      %v198 = vld [vmem:[%s169 + $0xa8] sm:$0xff]
      %v199 = vld [vmem:[%s169 + $0xb0] sm:$0xff]
      %v200 = vld [vmem:[%s169 + $0xb8] sm:$0xff]
      %v201 = vld [vmem:[%s169 + $0xc0] sm:$0xff]
      %v202 = vld [vmem:[%s169 + $0xc8] sm:$0xff]
      %v203 = vld [vmem:[%s169 + $0xd0] sm:$0xff]
      %v204 = vld [vmem:[%s169 + $0xd8] sm:$0xff]
      %v205 = vld [vmem:[%s169 + $0xe0] sm:$0xff]
      %v206 = vld [vmem:[%s169 + $0xe8] sm:$0xff]
      %v207 = vld [vmem:[%s169 + $0xf0] sm:$0xff]
      %v208 = vld [vmem:[%s169 + $0xf8] sm:$0xff]
      %v209 = vld [vmem:[%s169 + $0x100] sm:$0xff]
      %v210 = vld [vmem:[%s169 + $0x108] sm:$0xff]
      %v211 = vld [vmem:[%s169 + $0x110] sm:$0xff]
      %v212 = vld [vmem:[%s169 + $0x118] sm:$0xff]
      %v213 = vld [vmem:[%s169 + $0x120] sm:$0xff]
      %v214 = vld [vmem:[%s1] sm:$0xf]
      %v215 = vld [vmem:[%s1 + $0x4] sm:$0xf]
      %v216 = vld [vmem:[%s1 + $0x8] sm:$0xf]
      %v217 = vld [vmem:[%s1 + $0xc] sm:$0xf]
      %v218 = vld [vmem:[%s1 + $0x10] sm:$0xf]
      %v219 = vld [vmem:[%s1 + $0x14] sm:$0xf]
      %v220 = vld [vmem:[%s1 + $0x18] sm:$0xf]
      %v221 = vld [vmem:[%s1 + $0x1c] sm:$0xf]
      %v222 = vld [vmem:[%s1 + $0x20] sm:$0xf]
      %v223 = vld [vmem:[%s1 + $0x24] sm:$0xf]
      %v224 = vld [vmem:[%s1 + $0x28] sm:$0xf]
      %v225 = vld [vmem:[%s1 + $0x2c] sm:$0xf]
      %v226 = vld [vmem:[%s1 + $0x30] sm:$0xf]
      %v227 = vld [vmem:[%s1 + $0x34] sm:$0xf]
      %v228 = vld [vmem:[%s1 + $0x38] sm:$0xf]
      %v229 = vld [vmem:[%s1 + $0x3c] sm:$0xf]
      %v230 = vld [vmem:[%s1 + $0x40] sm:$0xf]
      %v231 = vld [vmem:[%s1 + $0x44] sm:$0xf]
      %v232 = vld [vmem:[%s1 + $0x48] sm:$0xf]
      %v233 = vld [vmem:[%s1 + $0x4c] sm:$0xf]
      %v234 = vld [vmem:[%s1 + $0x50] sm:$0xf]
      %v235 = vld [vmem:[%s1 + $0x54] sm:$0xf]
      %v236 = vld [vmem:[%s1 + $0x58] sm:$0xf]
      %v237 = vld [vmem:[%s1 + $0x5c] sm:$0xf]
      %v238 = vld [vmem:[%s1 + $0x60] sm:$0xf]
      %v239 = vld [vmem:[%s1 + $0x64] sm:$0xf]
      %v240 = vld [vmem:[%s1 + $0x68] sm:$0xf]
      %v241 = vld [vmem:[%s1 + $0x6c] sm:$0xf]
      %v242 = vld [vmem:[%s1 + $0x70] sm:$0xf]
      %v243 = vld [vmem:[%s1 + $0x74] sm:$0xf]
      %v244 = vld [vmem:[%s1 + $0x78] sm:$0xf]
      %v245 = vld [vmem:[%s1 + $0x7c] sm:$0xf]
      %v246 = vld [vmem:[%s2] sm:$0x1]
      %v248 = vperm.slane %v246, 0
      %v287 = vunpack.c.l.b16 %v177
      %v288 = vunpack.c.h.b16 %v177
      %v289 = vunpack.c.l.b16 %v178
      %v290 = vunpack.c.h.b16 %v178
      %v291 = vunpack.c.l.b16 %v179
      %v292 = vunpack.c.h.b16 %v179
      %v293 = vunpack.c.l.b16 %v180
      %v294 = vunpack.c.h.b16 %v180
      %v295 = vunpack.c.l.b16 %v181
      %v296 = vunpack.c.h.b16 %v181
      %v297 = vunpack.c.l.b16 %v182
      %v298 = vunpack.c.h.b16 %v182
      %v299 = vunpack.c.l.b16 %v183
      %v300 = vunpack.c.h.b16 %v183
      %v301 = vunpack.c.l.b16 %v184
      %v302 = vunpack.c.h.b16 %v184
      %v303 = vunpack.c.l.b16 %v185
      %v304 = vunpack.c.h.b16 %v185
      %v305 = vunpack.c.l.b16 %v186
      %v306 = vunpack.c.h.b16 %v186
      %v307 = vunpack.c.l.b16 %v187
      %v308 = vunpack.c.h.b16 %v187
      %v309 = vunpack.c.l.b16 %v188
      %v310 = vunpack.c.h.b16 %v188
      %v311 = vunpack.c.l.b16 %v189
      %v312 = vunpack.c.h.b16 %v189
      %v313 = vunpack.c.l.b16 %v190
      %v314 = vunpack.c.h.b16 %v190
      %v315 = vunpack.c.l.b16 %v191
      %v316 = vunpack.c.h.b16 %v191
      %v317 = vunpack.c.l.b16 %v192
      %v318 = vunpack.c.h.b16 %v192
      %v319 = vunpack.c.l.b16 %v193
      %v320 = vunpack.c.h.b16 %v193
      %v321 = vunpack.c.l.b16 %v194
      %v322 = vunpack.c.h.b16 %v194
      %v323 = vunpack.c.l.b16 %v195
      %v324 = vunpack.c.h.b16 %v195
      %v325 = vunpack.c.l.b16 %v196
      %v326 = vunpack.c.h.b16 %v196
      %v327 = vunpack.c.l.b16 %v197
      %v328 = vunpack.c.h.b16 %v197
      %v329 = vunpack.c.l.b16 %v198
      %v330 = vunpack.c.h.b16 %v198
      %v331 = vunpack.c.l.b16 %v199
      %v332 = vunpack.c.h.b16 %v199
      %v333 = vunpack.c.l.b16 %v200
      %v334 = vunpack.c.h.b16 %v200
      %v335 = vunpack.c.l.b16 %v201
      %v336 = vunpack.c.h.b16 %v201
      %v337 = vunpack.c.l.b16 %v202
      %v338 = vunpack.c.h.b16 %v202
      %v339 = vunpack.c.l.b16 %v203
      %v340 = vunpack.c.h.b16 %v203
      %v341 = vunpack.c.l.b16 %v204
      %v342 = vunpack.c.h.b16 %v204
      %v343 = vunpack.c.l.b16 %v205
      %v344 = vunpack.c.h.b16 %v205
      %v345 = vunpack.c.l.b16 %v206
      %v346 = vunpack.c.h.b16 %v206
      %v347 = vunpack.c.l.b16 %v207
      %v348 = vunpack.c.h.b16 %v207
      %v349 = vunpack.c.l.b16 %v208
      %v350 = vunpack.c.h.b16 %v208
      %v351 = vunpack.c.l.b16 %v209
      %v352 = vunpack.c.h.b16 %v209
      %v353 = vunpack.c.l.b16 %v210
      %v354 = vunpack.c.h.b16 %v210
      %v355 = vunpack.c.l.b16 %v211
      %v356 = vunpack.c.h.b16 %v211
      %v357 = vunpack.c.l.b16 %v212
      %v358 = vunpack.c.h.b16 %v212
      %v359 = vunpack.c.l.b16 %v213
      %v360 = vunpack.c.h.b16 %v213
      %v361 = vpack.c.b16 %v289, %v287
      %v362 = vpack.c.b16 %v290, %v288
      %v363 = vpack.c.b16 %v293, %v291
      %v364 = vpack.c.b16 %v294, %v292
      %v365 = vpack.c.b16 %v297, %v295
      %v366 = vpack.c.b16 %v298, %v296
      %v367 = vpack.c.b16 %v301, %v299
      %v368 = vpack.c.b16 %v302, %v300
      %v369 = vpack.c.b16 %v305, %v303
      %v370 = vpack.c.b16 %v306, %v304
      %v371 = vpack.c.b16 %v309, %v307
      %v372 = vpack.c.b16 %v310, %v308
      %v373 = vpack.c.b16 %v313, %v311
      %v374 = vpack.c.b16 %v314, %v312
      %v375 = vpack.c.b16 %v317, %v315
      %v376 = vpack.c.b16 %v318, %v316
      %v377 = vpack.c.b16 %v321, %v319
      %v378 = vpack.c.b16 %v322, %v320
      %v379 = vpack.c.b16 %v325, %v323
      %v380 = vpack.c.b16 %v326, %v324
      %v381 = vpack.c.b16 %v329, %v327
      %v382 = vpack.c.b16 %v330, %v328
      %v383 = vpack.c.b16 %v333, %v331
      %v384 = vpack.c.b16 %v334, %v332
      %v385 = vpack.c.b16 %v337, %v335
      %v386 = vpack.c.b16 %v338, %v336
      %v387 = vpack.c.b16 %v341, %v339
      %v388 = vpack.c.b16 %v342, %v340
      %v389 = vpack.c.b16 %v345, %v343
      %v390 = vpack.c.b16 %v346, %v344
      %v391 = vpack.c.b16 %v349, %v347
      %v392 = vpack.c.b16 %v350, %v348
      %v393 = vpack.c.b16 %v353, %v351
      %v394 = vpack.c.b16 %v354, %v352
      %v395 = vpack.c.b16 %v357, %v355
      %v396 = vpack.c.b16 %v358, %v356
      %v397 = vpack.c.b16 %v359, %v359
      %v398 = vpack.c.b16 %v360, %v360
      %v469 = vunpack.c.l.b16 %v214
      %v470 = vunpack.c.l.b16 %v215
      %v471 = vunpack.c.l.b16 %v216
      %v472 = vunpack.c.l.b16 %v217
      %v473 = vunpack.c.l.b16 %v218
      %v474 = vunpack.c.l.b16 %v219
      %v475 = vunpack.c.l.b16 %v220
      %v476 = vunpack.c.l.b16 %v221
      %v477 = vunpack.c.l.b16 %v222
      %v478 = vunpack.c.l.b16 %v223
      %v479 = vunpack.c.l.b16 %v224
      %v480 = vunpack.c.l.b16 %v225
      %v481 = vunpack.c.l.b16 %v226
      %v482 = vunpack.c.l.b16 %v227
      %v483 = vunpack.c.l.b16 %v228
      %v484 = vunpack.c.l.b16 %v229
      %v485 = vunpack.c.l.b16 %v230
      %v486 = vunpack.c.l.b16 %v231
      %v487 = vunpack.c.l.b16 %v232
      %v488 = vunpack.c.l.b16 %v233
      %v489 = vunpack.c.l.b16 %v234
      %v490 = vunpack.c.l.b16 %v235
      %v491 = vunpack.c.l.b16 %v236
      %v492 = vunpack.c.l.b16 %v237
      %v493 = vunpack.c.l.b16 %v238
      %v494 = vunpack.c.l.b16 %v239
      %v495 = vunpack.c.l.b16 %v240
      %v496 = vunpack.c.l.b16 %v241
      %v497 = vunpack.c.l.b16 %v242
      %v498 = vunpack.c.l.b16 %v243
      %v499 = vunpack.c.l.b16 %v244
      %v500 = vunpack.c.l.b16 %v245
      %v501 = vpack.c.b16 %v470, %v469
      %v502 = vpack.c.b16 %v472, %v471
      %v503 = vpack.c.b16 %v474, %v473
      %v504 = vpack.c.b16 %v476, %v475
      %v505 = vpack.c.b16 %v478, %v477
      %v506 = vpack.c.b16 %v480, %v479
      %v507 = vpack.c.b16 %v482, %v481
      %v508 = vpack.c.b16 %v484, %v483
      %v509 = vpack.c.b16 %v486, %v485
      %v510 = vpack.c.b16 %v488, %v487
      %v511 = vpack.c.b16 %v490, %v489
      %v512 = vpack.c.b16 %v492, %v491
      %v513 = vpack.c.b16 %v494, %v493
      %v514 = vpack.c.b16 %v496, %v495
      %v515 = vpack.c.b16 %v498, %v497
      %v516 = vpack.c.b16 %v500, %v499
      %533 = vmatpush.bf16.msra.mxu0 %v508
      %534 = vmatpush.bf16.msra.mxu0 %v507
      %535 = vmatpush.bf16.msra.mxu0 %v506
      %536 = vmatpush.bf16.msra.mxu0 %v505
      %537 = vmatpush.bf16.msra.mxu0 %v504
      %538 = vmatpush.bf16.msra.mxu0 %v503
      %539 = vmatpush.bf16.msra.mxu0 %v502
      %540 = vmatpush.bf16.msra.mxu0 %v501
      %541 = vmatmul.bf16.gmra.mxu0 %v361
      %v542 = vpop.f32.mrf.mxu0
      %v543 = vadd.f32 %v248, %v542
      %v544 = vpop.f32.mrf.mxu0
      %v545 = vadd.f32 %v248, %v544
      %546 = vmatmul.bf16.gmra.mxu0 %v363
      %v547 = vpop.f32.mrf.mxu0
      %v548 = vadd.f32 %v248, %v547
      %v549 = vpop.f32.mrf.mxu0
      %v550 = vadd.f32 %v248, %v549
      %551 = vmatmul.bf16.gmra.mxu0 %v365
      %v552 = vpop.f32.mrf.mxu0
      %v553 = vadd.f32 %v248, %v552
      %v554 = vpop.f32.mrf.mxu0
      %v555 = vadd.f32 %v248, %v554
      %556 = vmatmul.bf16.gmra.mxu0 %v367
      %v557 = vpop.f32.mrf.mxu0
      %v558 = vadd.f32 %v248, %v557
      %v559 = vpop.f32.mrf.mxu0
      %v560 = vadd.f32 %v248, %v559
      %561 = vmatmul.bf16.gmra.mxu0 %v369
      %v562 = vpop.f32.mrf.mxu0
      %v563 = vadd.f32 %v248, %v562
      %v564 = vpop.f32.mrf.mxu0
      %v565 = vadd.f32 %v248, %v564
      %566 = vmatmul.bf16.gmra.mxu0 %v371
      %v567 = vpop.f32.mrf.mxu0
      %v568 = vadd.f32 %v248, %v567
      %v569 = vpop.f32.mrf.mxu0
      %v570 = vadd.f32 %v248, %v569
      %571 = vmatmul.bf16.gmra.mxu0 %v373
      %v572 = vpop.f32.mrf.mxu0
      %v573 = vadd.f32 %v248, %v572
      %v574 = vpop.f32.mrf.mxu0
      %v575 = vadd.f32 %v248, %v574
      %576 = vmatmul.bf16.gmra.mxu0 %v375
      %v577 = vpop.f32.mrf.mxu0
      %v578 = vadd.f32 %v248, %v577
      %v579 = vpop.f32.mrf.mxu0
      %v580 = vadd.f32 %v248, %v579
      %581 = vmatmul.bf16.gmra.mxu0 %v377
      %v582 = vpop.f32.mrf.mxu0
      %v583 = vadd.f32 %v248, %v582
      %v584 = vpop.f32.mrf.mxu0
      %v585 = vadd.f32 %v248, %v584
      %586 = vmatmul.bf16.gmra.mxu0 %v379
      %v587 = vpop.f32.mrf.mxu0
      %v588 = vadd.f32 %v248, %v587
      %v589 = vpop.f32.mrf.mxu0
      %v590 = vadd.f32 %v248, %v589
      %591 = vmatmul.bf16.gmra.mxu0 %v381
      %v592 = vpop.f32.mrf.mxu0
      %v593 = vadd.f32 %v248, %v592
      %v594 = vpop.f32.mrf.mxu0
      %v595 = vadd.f32 %v248, %v594
      %596 = vmatmul.bf16.gmra.mxu0 %v383
      %v597 = vpop.f32.mrf.mxu0
      %v598 = vadd.f32 %v248, %v597
      %v599 = vpop.f32.mrf.mxu0
      %v600 = vadd.f32 %v248, %v599
      %601 = vmatmul.bf16.gmra.mxu0 %v385
      %v602 = vpop.f32.mrf.mxu0
      %v603 = vadd.f32 %v248, %v602
      %v604 = vpop.f32.mrf.mxu0
      %v605 = vadd.f32 %v248, %v604
      %606 = vmatmul.bf16.gmra.mxu0 %v387
      %v607 = vpop.f32.mrf.mxu0
      %v608 = vadd.f32 %v248, %v607
      %v609 = vpop.f32.mrf.mxu0
      %v610 = vadd.f32 %v248, %v609
      %611 = vmatmul.bf16.gmra.mxu0 %v389
      %v612 = vpop.f32.mrf.mxu0
      %v613 = vadd.f32 %v248, %v612
      %v614 = vpop.f32.mrf.mxu0
      %v615 = vadd.f32 %v248, %v614
      %616 = vmatmul.bf16.gmra.mxu0 %v391
      %v617 = vpop.f32.mrf.mxu0
      %v618 = vadd.f32 %v248, %v617
      %v619 = vpop.f32.mrf.mxu0
      %v620 = vadd.f32 %v248, %v619
      %621 = vmatmul.bf16.gmra.mxu0 %v393
      %v622 = vpop.f32.mrf.mxu0
      %v623 = vadd.f32 %v248, %v622
      %v624 = vpop.f32.mrf.mxu0
      %v625 = vadd.f32 %v248, %v624
      %626 = vmatmul.bf16.gmra.mxu0 %v395
      %v627 = vpop.f32.mrf.mxu0
      %v628 = vadd.f32 %v248, %v627
      %v629 = vpop.f32.mrf.mxu0
      %v630 = vadd.f32 %v248, %v629
      %631 = vmatmul.bf16.gmra.mxu0 %v397
      %v632 = vpop.f32.mrf.mxu0
      %v633 = vadd.f32 %v248, %v632
      %v634 = vpop.f32.mrf.mxu0
      %635 = vdwg.mxu0
      %636 = vmatpush.bf16.msra.mxu0 %v516
      %637 = vmatpush.bf16.msra.mxu0 %v515
      %638 = vmatpush.bf16.msra.mxu0 %v514
      %639 = vmatpush.bf16.msra.mxu0 %v513
      %640 = vmatpush.bf16.msra.mxu0 %v512
      %641 = vmatpush.bf16.msra.mxu0 %v511
      %642 = vmatpush.bf16.msra.mxu0 %v510
      %643 = vmatpush.bf16.msra.mxu0 %v509
      %644 = vmatmul.bf16.gmra.mxu0 %v362
      %v645 = vpop.f32.mrf.mxu0
      %v646 = vadd.f32 %v543, %v645
      %v647 = vpop.f32.mrf.mxu0
      %v648 = vadd.f32 %v545, %v647
      %649 = vmatmul.bf16.gmra.mxu0 %v364
      %v650 = vpop.f32.mrf.mxu0
      %v651 = vadd.f32 %v548, %v650
      %v652 = vpop.f32.mrf.mxu0
      %v653 = vadd.f32 %v550, %v652
      %654 = vmatmul.bf16.gmra.mxu0 %v366
      %v655 = vpop.f32.mrf.mxu0
      %v656 = vadd.f32 %v553, %v655
      %v657 = vpop.f32.mrf.mxu0
      %v658 = vadd.f32 %v555, %v657
      %659 = vmatmul.bf16.gmra.mxu0 %v368
      %v660 = vpop.f32.mrf.mxu0
      %v661 = vadd.f32 %v558, %v660
      %v662 = vpop.f32.mrf.mxu0
      %v663 = vadd.f32 %v560, %v662
      %664 = vmatmul.bf16.gmra.mxu0 %v370
      %v665 = vpop.f32.mrf.mxu0
      %v666 = vadd.f32 %v563, %v665
      %v667 = vpop.f32.mrf.mxu0
      %v668 = vadd.f32 %v565, %v667
      %669 = vmatmul.bf16.gmra.mxu0 %v372
      %v670 = vpop.f32.mrf.mxu0
      %v671 = vadd.f32 %v568, %v670
      %v672 = vpop.f32.mrf.mxu0
      %v673 = vadd.f32 %v570, %v672
      %674 = vmatmul.bf16.gmra.mxu0 %v374
      %v675 = vpop.f32.mrf.mxu0
      %v676 = vadd.f32 %v573, %v675
      %v677 = vpop.f32.mrf.mxu0
      %v678 = vadd.f32 %v575, %v677
      %679 = vmatmul.bf16.gmra.mxu0 %v376
      %v680 = vpop.f32.mrf.mxu0
      %v681 = vadd.f32 %v578, %v680
      %v682 = vpop.f32.mrf.mxu0
      %v683 = vadd.f32 %v580, %v682
      %684 = vmatmul.bf16.gmra.mxu0 %v378
      %v685 = vpop.f32.mrf.mxu0
      %v686 = vadd.f32 %v583, %v685
      %v687 = vpop.f32.mrf.mxu0
      %v688 = vadd.f32 %v585, %v687
      %689 = vmatmul.bf16.gmra.mxu0 %v380
      %v690 = vpop.f32.mrf.mxu0
      %v691 = vadd.f32 %v588, %v690
      %v692 = vpop.f32.mrf.mxu0
      %v693 = vadd.f32 %v590, %v692
      %694 = vmatmul.bf16.gmra.mxu0 %v382
      %v695 = vpop.f32.mrf.mxu0
      %v696 = vadd.f32 %v593, %v695
      %v697 = vpop.f32.mrf.mxu0
      %v698 = vadd.f32 %v595, %v697
      %699 = vmatmul.bf16.gmra.mxu0 %v384
      %v700 = vpop.f32.mrf.mxu0
      %v701 = vadd.f32 %v598, %v700
      %v702 = vpop.f32.mrf.mxu0
      %v703 = vadd.f32 %v600, %v702
      %704 = vmatmul.bf16.gmra.mxu0 %v386
      %v705 = vpop.f32.mrf.mxu0
      %v706 = vadd.f32 %v603, %v705
      %v707 = vpop.f32.mrf.mxu0
      %v708 = vadd.f32 %v605, %v707
      %709 = vmatmul.bf16.gmra.mxu0 %v388
      %v710 = vpop.f32.mrf.mxu0
      %v711 = vadd.f32 %v608, %v710
      %v712 = vpop.f32.mrf.mxu0
      %v713 = vadd.f32 %v610, %v712
      %714 = vmatmul.bf16.gmra.mxu0 %v390
      %v715 = vpop.f32.mrf.mxu0
      %v716 = vadd.f32 %v613, %v715
      %v717 = vpop.f32.mrf.mxu0
      %v718 = vadd.f32 %v615, %v717
      %719 = vmatmul.bf16.gmra.mxu0 %v392
      %v720 = vpop.f32.mrf.mxu0
      %v721 = vadd.f32 %v618, %v720
      %v722 = vpop.f32.mrf.mxu0
      %v723 = vadd.f32 %v620, %v722
      %724 = vmatmul.bf16.gmra.mxu0 %v394
      %v725 = vpop.f32.mrf.mxu0
      %v726 = vadd.f32 %v623, %v725
      %v727 = vpop.f32.mrf.mxu0
      %v728 = vadd.f32 %v625, %v727
      %729 = vmatmul.bf16.gmra.mxu0 %v396
      %v730 = vpop.f32.mrf.mxu0
      %v731 = vadd.f32 %v628, %v730
      %v732 = vpop.f32.mrf.mxu0
      %v733 = vadd.f32 %v630, %v732
      %734 = vmatmul.bf16.gmra.mxu0 %v398
      %v735 = vpop.f32.mrf.mxu0
      %v736 = vadd.f32 %v633, %v735
      %v737 = vpop.f32.mrf.mxu0
      %738 = vdwg.mxu0
      %v739 = vmax.f32 %v646, 0.0
      %v740 = vmax.f32 %v648, 0.0
      %v741 = vmax.f32 %v651, 0.0
      %v742 = vmax.f32 %v653, 0.0
      %v743 = vmax.f32 %v656, 0.0
      %v744 = vmax.f32 %v658, 0.0
      %v745 = vmax.f32 %v661, 0.0
      %v746 = vmax.f32 %v663, 0.0
      %v747 = vmax.f32 %v666, 0.0
      %v748 = vmax.f32 %v668, 0.0
      %v749 = vmax.f32 %v671, 0.0
      %v750 = vmax.f32 %v673, 0.0
      %v751 = vmax.f32 %v676, 0.0
      %v752 = vmax.f32 %v678, 0.0
      %v753 = vmax.f32 %v681, 0.0
      %v754 = vmax.f32 %v683, 0.0
      %v755 = vmax.f32 %v686, 0.0
      %v756 = vmax.f32 %v688, 0.0
      %v757 = vmax.f32 %v691, 0.0
      %v758 = vmax.f32 %v693, 0.0
      %v759 = vmax.f32 %v696, 0.0
      %v760 = vmax.f32 %v698, 0.0
      %v761 = vmax.f32 %v701, 0.0
      %v762 = vmax.f32 %v703, 0.0
      %v763 = vmax.f32 %v706, 0.0
      %v764 = vmax.f32 %v708, 0.0
      %v765 = vmax.f32 %v711, 0.0
      %v766 = vmax.f32 %v713, 0.0
      %v767 = vmax.f32 %v716, 0.0
      %v768 = vmax.f32 %v718, 0.0
      %v769 = vmax.f32 %v721, 0.0
      %v770 = vmax.f32 %v723, 0.0
      %v771 = vmax.f32 %v726, 0.0
      %v772 = vmax.f32 %v728, 0.0
      %v773 = vmax.f32 %v731, 0.0
      %v774 = vmax.f32 %v733, 0.0
      %v775 = vmax.f32 %v736, 0.0
      %v776 = vpack.c.bf16 %v739, %v739
      %v777 = vpack.c.bf16 %v740, %v740
      %v778 = vpack.c.bf16 %v741, %v741
      %v779 = vpack.c.bf16 %v742, %v742
      %v780 = vpack.c.bf16 %v743, %v743
      %v781 = vpack.c.bf16 %v744, %v744
      %v782 = vpack.c.bf16 %v745, %v745
      %v783 = vpack.c.bf16 %v746, %v746
      %v784 = vpack.c.bf16 %v747, %v747
      %v785 = vpack.c.bf16 %v748, %v748
      %v786 = vpack.c.bf16 %v749, %v749
      %v787 = vpack.c.bf16 %v750, %v750
      %v788 = vpack.c.bf16 %v751, %v751
      %v789 = vpack.c.bf16 %v752, %v752
      %v790 = vpack.c.bf16 %v753, %v753
      %v791 = vpack.c.bf16 %v754, %v754
      %v792 = vpack.c.bf16 %v755, %v755
      %v793 = vpack.c.bf16 %v756, %v756
      %v794 = vpack.c.bf16 %v757, %v757
      %v795 = vpack.c.bf16 %v758, %v758
      %v796 = vpack.c.bf16 %v759, %v759
      %v797 = vpack.c.bf16 %v760, %v760
      %v798 = vpack.c.bf16 %v761, %v761
      %v799 = vpack.c.bf16 %v762, %v762
      %v800 = vpack.c.bf16 %v763, %v763
      %v801 = vpack.c.bf16 %v764, %v764
      %v802 = vpack.c.bf16 %v765, %v765
      %v803 = vpack.c.bf16 %v766, %v766
      %v804 = vpack.c.bf16 %v767, %v767
      %v805 = vpack.c.bf16 %v768, %v768
      %v806 = vpack.c.bf16 %v769, %v769
      %v807 = vpack.c.bf16 %v770, %v770
      %v808 = vpack.c.bf16 %v771, %v771
      %v809 = vpack.c.bf16 %v772, %v772
      %v810 = vpack.c.bf16 %v773, %v773
      %v811 = vpack.c.bf16 %v774, %v774
      %v812 = vpack.c.bf16 %v775, %v775
      %813 = vst [vmem:[%s175] sm:$0xf] %v776
      %814 = vst [vmem:[%s175 + $0x4] sm:$0xf] %v777
      %815 = vst [vmem:[%s175 + $0x8] sm:$0xf] %v778
      %816 = vst [vmem:[%s175 + $0xc] sm:$0xf] %v779
      %817 = vst [vmem:[%s175 + $0x10] sm:$0xf] %v780
      %818 = vst [vmem:[%s175 + $0x14] sm:$0xf] %v781
      %819 = vst [vmem:[%s175 + $0x18] sm:$0xf] %v782
      %820 = vst [vmem:[%s175 + $0x1c] sm:$0xf] %v783
      %821 = vst [vmem:[%s175 + $0x20] sm:$0xf] %v784
      %822 = vst [vmem:[%s175 + $0x24] sm:$0xf] %v785
      %823 = vst [vmem:[%s175 + $0x28] sm:$0xf] %v786
      %824 = vst [vmem:[%s175 + $0x2c] sm:$0xf] %v787
      %825 = vst [vmem:[%s175 + $0x30] sm:$0xf] %v788
      %826 = vst [vmem:[%s175 + $0x34] sm:$0xf] %v789
      %827 = vst [vmem:[%s175 + $0x38] sm:$0xf] %v790
      %828 = vst [vmem:[%s175 + $0x3c] sm:$0xf] %v791
      %829 = vst [vmem:[%s175 + $0x40] sm:$0xf] %v792
      %830 = vst [vmem:[%s175 + $0x44] sm:$0xf] %v793
      %831 = vst [vmem:[%s175 + $0x48] sm:$0xf] %v794
      %832 = vst [vmem:[%s175 + $0x4c] sm:$0xf] %v795
      %833 = vst [vmem:[%s175 + $0x50] sm:$0xf] %v796
      %834 = vst [vmem:[%s175 + $0x54] sm:$0xf] %v797
      %835 = vst [vmem:[%s175 + $0x58] sm:$0xf] %v798
      %836 = vst [vmem:[%s175 + $0x5c] sm:$0xf] %v799
      %837 = vst [vmem:[%s175 + $0x60] sm:$0xf] %v800
      %838 = vst [vmem:[%s175 + $0x64] sm:$0xf] %v801
      %839 = vst [vmem:[%s175 + $0x68] sm:$0xf] %v802
      %840 = vst [vmem:[%s175 + $0x6c] sm:$0xf] %v803
      %841 = vst [vmem:[%s175 + $0x70] sm:$0xf] %v804
      %842 = vst [vmem:[%s175 + $0x74] sm:$0xf] %v805
      %843 = vst [vmem:[%s175 + $0x78] sm:$0xf] %v806
      %844 = vst [vmem:[%s175 + $0x7c] sm:$0xf] %v807
      %845 = vst [vmem:[%s175 + $0x80] sm:$0xf] %v808
      %846 = vst [vmem:[%s175 + $0x84] sm:$0xf] %v809
      %847 = vst [vmem:[%s175 + $0x88] sm:$0xf] %v810
      %848 = vst [vmem:[%s175 + $0x8c] sm:$0xf] %v811
      %849 = vst [vmem:[%s175 + $0x90] sm:$0xf] %v812
      %s850 = smul.u32 37, %s14
      %p851 = scmp.lt.s32.totalorder %s850, 73
      %s852 = scalar_select %p851, %s850, 73
      %s853 = smul.addr %s852, 4
      %s854 = scalar_lea.vmem %s3, %s853
      // Predicated region
      $region33: #{cnn_decoder.4} parent=31 // pred_check
        %p855 = pneg %p100
      $region34: #{cnn_decoder.4} parent=31 // pred_check_branch
        %857 = sbr.rel (%p855) target = $region36
      $region35: #{cnn_decoder.4} parent=31 // pred_region
        %s858 = smul.u32 37, %s14
      $region36: #{cnn_decoder.4} parent=31 // pred_fallthru
        _
    $region32: #{cnn_decoder.4} parent=5 // pred_fallthru
      _
    %p859 = scmp.le.s32.totalorder 2, %s9
    // Predicated region
    $region37: #{cnn_decoder.4} parent=5 // pred_check
      %p860 = pneg %p859
    $region38: #{cnn_decoder.4} parent=5 // pred_check_branch
      %862 = sbr.rel (%p860) target = $region40
    $region39: #{cnn_decoder.4} parent=5 // pred_region
      %s863 = ssub.s32 %s9, 2
      // Predicated region
      $region41: #{cnn_decoder.4} parent=39 // pred_check
        %p864 = pneg %p106
      $region42: #{cnn_decoder.4} parent=39 // pred_check_branch
        %866 = sbr.rel (%p864) target = $region44
      $region43: #{cnn_decoder.4} parent=39 // pred_region
        %s867 = smul.u32 37, %s15
        %p868 = scmp.lt.s32.totalorder %s867, 73
        %s869 = scalar_select %p868, %s867, 73
        %s870 = smul.addr %s869, 4
        %s871 = scalar_lea.vmem %s3, %s870
      $region44: #{cnn_decoder.4} parent=39 // pred_fallthru
        _
    $region40: #{cnn_decoder.4} parent=5 // pred_fallthru
      _
  $region6: #{cnn_decoder.4} parent=0 // loop_footer
    %s13 = sadd.s32 1, %s9
  $region7: #{cnn_decoder.4} parent=0 // loop_footer_branch
    %8 = sbr.rel target = $region3
  $region8: #{cnn_decoder.4} parent=0 // loop_exit
    _

// kernel: cnn_decoder.5
$region0: #{cnn_decoder.5}
  #allocation0 [shape = 'u32[]', space=smem, size = 0x4, offset = 0x4, fixed_abs, tag = 'smem constant byte address 0x4 - core index']
  #allocation1 [shape = 'u32[72,128]{1,0:T(1,128)}', space=vmem, size = 0x9000, scoped, tag = 'internal scratch']
  %s0 = inlined_call_operand.vmem [shape: bf16[8,128], index: 0, kind: input, shape index: {}]
  %s1 = inlined_call_operand.vmem [shape: bf16[128,2304], index: 1, kind: input, shape index: {}]
  %s2 = inlined_call_operand.vmem [shape: f32[8,1], index: 2, kind: input, shape index: {}]
  %s3 = inlined_call_operand.vmem [shape: f32[8,2304], index: 3, kind: output, shape index: {}]
  %s4 = sld [smem:[#allocation0]]
  $region71: #{cnn_decoder.5} parent=0
    _
  %s6 = ssub.s32 1, %s4
  %s7 = scalar_select 0, %s6, %s4
  $region1: #{cnn_decoder.5} parent=0
    #allocation2 [shape = 'u8[589824]{0}', space=vmem, size = 0x90000, scoped, tag = 'input window, operand 1']
    loop: start=0, step=1, limit=4
    $region2: #{cnn_decoder.5} parent=1 // loop_pre_header
      _
    $region3: #{cnn_decoder.5} parent=1 // loop_header
      %s9 = sphi 0, %s13
      %p10 = scmp.ge.s32.totalorder %s9, 4
      %s17 = sphi 0, %s17
      %s19 = sphi 0, %s17
      %s20 = sphi 0, %s19
      %s34 = sphi 0, %s20
      %s40 = sphi 0, %s42
      %s43 = sphi 0, %s40
      %s44 = sphi 0, %s43
      %s60 = sphi 0, %s44
      %s64 = sphi 0, %s64
      %s66 = sphi 0, %s64
      %s67 = sphi 0, %s66
      %s81 = sphi 0, %s67
      %s87 = sphi 0, %s89
      %s90 = sphi 0, %s87
      %s91 = sphi 0, %s90
      %s107 = sphi 0, %s91
    $region4: #{cnn_decoder.5} parent=1 // loop_header_branch
      %12 = sbr.rel (%p10) target = $region8
    $region5: #{cnn_decoder.5} parent=1 // loop_body
      %s14 = ssub.s32 %s9, 1
      %s15 = ssub.s32 %s9, 2
      %s16 = sadd.s32 %s9, 1
      %s18 = sadd.s32 %s17, 1
      %p21 = scmp.eq.s32.totalorder %s9, 1
      %p22 = scmp.ne.s32.totalorder %s17, %s19
      %p23 = scmp.eq.s32.totalorder %s9, 0
      %p24 = por %p22, %p23
      %p25 = scmp.ne.s32.totalorder %s17, %s19
      %p26 = scmp.eq.s32.totalorder %s14, 1
      %p27 = por %p25, %p26
      %p28 = scmp.ne.s32.totalorder %s19, %s20
      %p29 = scmp.eq.s32.totalorder %s14, 0
      %p30 = por %p28, %p29
      %p31 = scmp.ne.s32.totalorder %s19, %s20
      %p32 = scmp.eq.s32.totalorder %s15, 1
      %p33 = por %p31, %p32
      %p35 = scmp.ne.s32.totalorder %s20, %s34
      %p36 = scmp.eq.s32.totalorder %s15, 0
      %p37 = por %p35, %p36
      %s38 = ssub.s32 %s9, %s16
      %p39 = scmp.eq.s32.totalorder %s38, 0
      %s41 = sadd.s32 %s40, 1
      %s42 = scalar_select %p39, %s40, %s41
      %p45 = pneg %p39
      %p46 = scmp.eq.s32.totalorder %s9, 1
      %p47 = por %p45, %p46
      %p48 = scmp.ne.s32.totalorder %s40, %s43
      %p49 = scmp.eq.s32.totalorder %s9, 0
      %p50 = por %p48, %p49
      %p51 = scmp.ne.s32.totalorder %s40, %s43
      %p52 = scmp.eq.s32.totalorder %s14, 1
      %p53 = por %p51, %p52
      %p54 = scmp.ne.s32.totalorder %s43, %s44
      %p55 = scmp.eq.s32.totalorder %s14, 0
      %p56 = por %p54, %p55
      %p57 = scmp.ne.s32.totalorder %s43, %s44
      %p58 = scmp.eq.s32.totalorder %s15, 1
      %p59 = por %p57, %p58
      %p61 = scmp.ne.s32.totalorder %s44, %s60
      %p62 = scmp.eq.s32.totalorder %s15, 0
      %p63 = por %p61, %p62
      %s65 = sadd.s32 %s64, 1
      %p68 = scmp.eq.s32.totalorder %s9, 1
      %p69 = scmp.ne.s32.totalorder %s64, %s66
      %p70 = scmp.eq.s32.totalorder %s9, 0
      %p71 = por %p69, %p70
      %p72 = scmp.ne.s32.totalorder %s64, %s66
      %p73 = scmp.eq.s32.totalorder %s14, 1
      %p74 = por %p72, %p73
      %p75 = scmp.ne.s32.totalorder %s66, %s67
      %p76 = scmp.eq.s32.totalorder %s14, 0
      %p77 = por %p75, %p76
      %p78 = scmp.ne.s32.totalorder %s66, %s67
      %p79 = scmp.eq.s32.totalorder %s15, 1
      %p80 = por %p78, %p79
      %p82 = scmp.ne.s32.totalorder %s67, %s81
      %p83 = scmp.eq.s32.totalorder %s15, 0
      %p84 = por %p82, %p83
      %s85 = ssub.s32 %s9, %s16
      %p86 = scmp.eq.s32.totalorder %s85, 0
      %s88 = sadd.s32 %s87, 1
      %s89 = scalar_select %p86, %s87, %s88
      %p92 = pneg %p86
      %p93 = scmp.eq.s32.totalorder %s9, 1
      %p94 = por %p92, %p93
      %p95 = scmp.ne.s32.totalorder %s87, %s90
      %p96 = scmp.eq.s32.totalorder %s9, 0
      %p97 = por %p95, %p96
      %p98 = scmp.ne.s32.totalorder %s87, %s90
      %p99 = scmp.eq.s32.totalorder %s14, 1
      %p100 = por %p98, %p99
      %p101 = scmp.ne.s32.totalorder %s90, %s91
      %p102 = scmp.eq.s32.totalorder %s14, 0
      %p103 = por %p101, %p102
      %p104 = scmp.ne.s32.totalorder %s90, %s91
      %p105 = scmp.eq.s32.totalorder %s15, 1
      %p106 = por %p104, %p105
      %p108 = scmp.ne.s32.totalorder %s91, %s107
      %p109 = scmp.eq.s32.totalorder %s15, 0
      %p110 = por %p108, %p109
      %p111 = scmp.le.s32.totalorder 1, %s9
      %p112 = scmp.lt.s32.totalorder %s9, 3
      %p113 = pnand %p111, %p112
      %p114 = pneg %p113
      // Predicated region
      $region9: #{cnn_decoder.5} parent=5 // pred_check
        _
      $region10: #{cnn_decoder.5} parent=5 // pred_check_branch
        %116 = sbr.rel (%p113) target = $region12
      $region11: #{cnn_decoder.5} parent=5 // pred_region
        %s117 = ssub.s32 %s9, 1
        // Predicated region
        $region13: #{cnn_decoder.5} parent=11 // pred_check
          %p118 = pneg %p30
        $region14: #{cnn_decoder.5} parent=11 // pred_check_branch
          %120 = sbr.rel (%p118) target = $region16
        $region15: #{cnn_decoder.5} parent=11 // pred_region
          _
        $region16: #{cnn_decoder.5} parent=11 // pred_fallthru
          _
        // Predicated region
        $region17: #{cnn_decoder.5} parent=11 // pred_check
          %p121 = pneg %p77
        $region18: #{cnn_decoder.5} parent=11 // pred_check_branch
          %123 = sbr.rel (%p121) target = $region20
        $region19: #{cnn_decoder.5} parent=11 // pred_region
          _
        $region20: #{cnn_decoder.5} parent=11 // pred_fallthru
          _
      $region12: #{cnn_decoder.5} parent=5 // pred_fallthru
        _
      %p124 = scmp.lt.s32.totalorder %s9, 2
      // Predicated region
      $region21: #{cnn_decoder.5} parent=5 // pred_check
        %p125 = pneg %p124
      $region22: #{cnn_decoder.5} parent=5 // pred_check_branch
        %127 = sbr.rel (%p125) target = $region24
      $region23: #{cnn_decoder.5} parent=5 // pred_region
        // Predicated region
        $region25: #{cnn_decoder.5} parent=23 // pred_check
          %p128 = pneg %p50
        $region26: #{cnn_decoder.5} parent=23 // pred_check_branch
          %130 = sbr.rel (%p128) target = $region28
        $region27: #{cnn_decoder.5} parent=23 // pred_region
          %s131 = sand.u32 %s40, 1
          %s132 = sand.u32 %s40, 1
          %s133 = smul.addr %s132, 576
          %s134 = scalar_lea.vmem [#allocation2], %s133
          %s135 = smul.u32 9, %s9
          %s136 = smul.addr %s135, 4
          %s137 = scalar_lea.vmem %s1, %s136
          // Predicated region
          $region29: #{cnn_decoder.5} parent=27 // pred_check
            _
          $region30: #{cnn_decoder.5} parent=27 // pred_check_branch
            %139 = sbr.rel (0) target = $region32
          $region31: #{cnn_decoder.5} parent=27 // pred_region
            // Predicated region
            $region33: #{cnn_decoder.5} parent=31 // pred_check
              _
            $region34: #{cnn_decoder.5} parent=31 // pred_check_branch
              %141 = sbr.rel (0) target = $region36
            $region35: #{cnn_decoder.5} parent=31 // pred_region
              %s142 = scalar_lea.vmem %s137, 32
              %s143 = scalar_lea.vmem %s134, 32 [#allocation2]
              loop: start=0, step=1, limit=1
              $region37: #{cnn_decoder.5} parent=35 // loop_pre_header
                _
              $region38: #{cnn_decoder.5} parent=35 // loop_header
                %s145 = sphi 0, %s149
                %p146 = scmp.ge.s32.totalorder %s145, 1
                %s150 = sphi %s137, %s137
                %s151 = sphi %s134, %s134
              $region39: #{cnn_decoder.5} parent=35 // loop_header_branch
                %148 = sbr.rel (%p146) target = $region43
              $region40: #{cnn_decoder.5} parent=35 // loop_body
                %v152 = vld [vmem:[%s150] sm:$0xff]
                %153 = vst [vmem:[%s151] sm:$0xff] %v152
                %v154 = vld [vmem:[%s150 + $0x8] sm:$0xff]
                %155 = vst [vmem:[%s151 + $0x8] sm:$0xff] %v154
                %v156 = vld [vmem:[%s150 + $0x10] sm:$0xff]
                %157 = vst [vmem:[%s151 + $0x10] sm:$0xff] %v156
                %v158 = vld [vmem:[%s150 + $0x18] sm:$0xff]
                %159 = vst [vmem:[%s151 + $0x18] sm:$0xff] %v158
                %v160 = vld [vmem:[%s150 + $0x48] sm:$0xff]
                %161 = vst [vmem:[%s151 + $0x24] sm:$0xff] %v160
                %v162 = vld [vmem:[%s150 + $0x50] sm:$0xff]
                %163 = vst [vmem:[%s151 + $0x2c] sm:$0xff] %v162
                %v164 = vld [vmem:[%s150 + $0x58] sm:$0xff]
                %165 = vst [vmem:[%s151 + $0x34] sm:$0xff] %v164
                %v166 = vld [vmem:[%s150 + $0x60] sm:$0xff]
                %167 = vst [vmem:[%s151 + $0x3c] sm:$0xff] %v166
                %v168 = vld [vmem:[%s150 + $0x90] sm:$0xff]
                %169 = vst [vmem:[%s151 + $0x48] sm:$0xff] %v168
                %v170 = vld [vmem:[%s150 + $0x98] sm:$0xff]
                %171 = vst [vmem:[%s151 + $0x50] sm:$0xff] %v170
                %v172 = vld [vmem:[%s150 + $0xa0] sm:$0xff]
                %173 = vst [vmem:[%s151 + $0x58] sm:$0xff] %v172
                %v174 = vld [vmem:[%s150 + $0xa8] sm:$0xff]
                %175 = vst [vmem:[%s151 + $0x60] sm:$0xff] %v174
                %v176 = vld [vmem:[%s150 + $0xd8] sm:$0xff]
                %177 = vst [vmem:[%s151 + $0x6c] sm:$0xff] %v176
                %v178 = vld [vmem:[%s150 + $0xe0] sm:$0xff]
                %179 = vst [vmem:[%s151 + $0x74] sm:$0xff] %v178
                %v180 = vld [vmem:[%s150 + $0xe8] sm:$0xff]
                %181 = vst [vmem:[%s151 + $0x7c] sm:$0xff] %v180
                %v182 = vld [vmem:[%s150 + $0xf0] sm:$0xff]
                %183 = vst [vmem:[%s151 + $0x84] sm:$0xff] %v182
                %v184 = vld [vmem:[%s150 + $0x120] sm:$0xff]
                %185 = vst [vmem:[%s151 + $0x90] sm:$0xff] %v184
                %v186 = vld [vmem:[%s150 + $0x128] sm:$0xff]
                %187 = vst [vmem:[%s151 + $0x98] sm:$0xff] %v186
                %v188 = vld [vmem:[%s150 + $0x130] sm:$0xff]
                %189 = vst [vmem:[%s151 + $0xa0] sm:$0xff] %v188
                %v190 = vld [vmem:[%s150 + $0x138] sm:$0xff]
                %191 = vst [vmem:[%s151 + $0xa8] sm:$0xff] %v190
                %v192 = vld [vmem:[%s150 + $0x168] sm:$0xff]
                %193 = vst [vmem:[%s151 + $0xb4] sm:$0xff] %v192
                %v194 = vld [vmem:[%s150 + $0x170] sm:$0xff]
                %195 = vst [vmem:[%s151 + $0xbc] sm:$0xff] %v194
                %v196 = vld [vmem:[%s150 + $0x178] sm:$0xff]
                %197 = vst [vmem:[%s151 + $0xc4] sm:$0xff] %v196
                %v198 = vld [vmem:[%s150 + $0x180] sm:$0xff]
                %199 = vst [vmem:[%s151 + $0xcc] sm:$0xff] %v198
                %v200 = vld [vmem:[%s150 + $0x1b0] sm:$0xff]
                %201 = vst [vmem:[%s151 + $0xd8] sm:$0xff] %v200
                %v202 = vld [vmem:[%s150 + $0x1b8] sm:$0xff]
                %203 = vst [vmem:[%s151 + $0xe0] sm:$0xff] %v202
                %v204 = vld [vmem:[%s150 + $0x1c0] sm:$0xff]
                %205 = vst [vmem:[%s151 + $0xe8] sm:$0xff] %v204
                %v206 = vld [vmem:[%s150 + $0x1c8] sm:$0xff]
                %207 = vst [vmem:[%s151 + $0xf0] sm:$0xff] %v206
                %v208 = vld [vmem:[%s150 + $0x1f8] sm:$0xff]
                %209 = vst [vmem:[%s151 + $0xfc] sm:$0xff] %v208
                %v210 = vld [vmem:[%s150 + $0x200] sm:$0xff]
                %211 = vst [vmem:[%s151 + $0x104] sm:$0xff] %v210
                %v212 = vld [vmem:[%s150 + $0x208] sm:$0xff]
                %213 = vst [vmem:[%s151 + $0x10c] sm:$0xff] %v212
                %v214 = vld [vmem:[%s150 + $0x210] sm:$0xff]
                %215 = vst [vmem:[%s151 + $0x114] sm:$0xff] %v214
                %v216 = vld [vmem:[%s150 + $0x240] sm:$0xff]
                %217 = vst [vmem:[%s151 + $0x120] sm:$0xff] %v216
                %v218 = vld [vmem:[%s150 + $0x248] sm:$0xff]
                %219 = vst [vmem:[%s151 + $0x128] sm:$0xff] %v218
                %v220 = vld [vmem:[%s150 + $0x250] sm:$0xff]
                %221 = vst [vmem:[%s151 + $0x130] sm:$0xff] %v220
                %v222 = vld [vmem:[%s150 + $0x258] sm:$0xff]
                %223 = vst [vmem:[%s151 + $0x138] sm:$0xff] %v222
                %v224 = vld [vmem:[%s150 + $0x288] sm:$0xff]
                %225 = vst [vmem:[%s151 + $0x144] sm:$0xff] %v224
                %v226 = vld [vmem:[%s150 + $0x290] sm:$0xff]
                %227 = vst [vmem:[%s151 + $0x14c] sm:$0xff] %v226
                %v228 = vld [vmem:[%s150 + $0x298] sm:$0xff]
                %229 = vst [vmem:[%s151 + $0x154] sm:$0xff] %v228
                %v230 = vld [vmem:[%s150 + $0x2a0] sm:$0xff]
                %231 = vst [vmem:[%s151 + $0x15c] sm:$0xff] %v230
                %v232 = vld [vmem:[%s150 + $0x2d0] sm:$0xff]
                %233 = vst [vmem:[%s151 + $0x168] sm:$0xff] %v232
                %v234 = vld [vmem:[%s150 + $0x2d8] sm:$0xff]
                %235 = vst [vmem:[%s151 + $0x170] sm:$0xff] %v234
                %v236 = vld [vmem:[%s150 + $0x2e0] sm:$0xff]
                %237 = vst [vmem:[%s151 + $0x178] sm:$0xff] %v236
                %v238 = vld [vmem:[%s150 + $0x2e8] sm:$0xff]
                %239 = vst [vmem:[%s151 + $0x180] sm:$0xff] %v238
                %v240 = vld [vmem:[%s150 + $0x318] sm:$0xff]
                %241 = vst [vmem:[%s151 + $0x18c] sm:$0xff] %v240
                %v242 = vld [vmem:[%s150 + $0x320] sm:$0xff]
                %243 = vst [vmem:[%s151 + $0x194] sm:$0xff] %v242
                %v244 = vld [vmem:[%s150 + $0x328] sm:$0xff]
                %245 = vst [vmem:[%s151 + $0x19c] sm:$0xff] %v244
                %v246 = vld [vmem:[%s150 + $0x330] sm:$0xff]
                %247 = vst [vmem:[%s151 + $0x1a4] sm:$0xff] %v246
                %v248 = vld [vmem:[%s150 + $0x360] sm:$0xff]
                %249 = vst [vmem:[%s151 + $0x1b0] sm:$0xff] %v248
                %v250 = vld [vmem:[%s150 + $0x368] sm:$0xff]
                %251 = vst [vmem:[%s151 + $0x1b8] sm:$0xff] %v250
                %v252 = vld [vmem:[%s150 + $0x370] sm:$0xff]
                %253 = vst [vmem:[%s151 + $0x1c0] sm:$0xff] %v252
                %v254 = vld [vmem:[%s150 + $0x378] sm:$0xff]
                %255 = vst [vmem:[%s151 + $0x1c8] sm:$0xff] %v254
                %v256 = vld [vmem:[%s150 + $0x3a8] sm:$0xff]
                %257 = vst [vmem:[%s151 + $0x1d4] sm:$0xff] %v256
                %v258 = vld [vmem:[%s150 + $0x3b0] sm:$0xff]
                %259 = vst [vmem:[%s151 + $0x1dc] sm:$0xff] %v258
                %v260 = vld [vmem:[%s150 + $0x3b8] sm:$0xff]
                %261 = vst [vmem:[%s151 + $0x1e4] sm:$0xff] %v260
                %v262 = vld [vmem:[%s150 + $0x3c0] sm:$0xff]
                %263 = vst [vmem:[%s151 + $0x1ec] sm:$0xff] %v262
                %v264 = vld [vmem:[%s150 + $0x3f0] sm:$0xff]
                %265 = vst [vmem:[%s151 + $0x1f8] sm:$0xff] %v264
                %v266 = vld [vmem:[%s150 + $0x3f8] sm:$0xff]
                %267 = vst [vmem:[%s151 + $0x200] sm:$0xff] %v266
                %v268 = vld [vmem:[%s150 + $0x400] sm:$0xff]
                %269 = vst [vmem:[%s151 + $0x208] sm:$0xff] %v268
                %v270 = vld [vmem:[%s150 + $0x408] sm:$0xff]
                %271 = vst [vmem:[%s151 + $0x210] sm:$0xff] %v270
                %v272 = vld [vmem:[%s150 + $0x438] sm:$0xff]
                %273 = vst [vmem:[%s151 + $0x21c] sm:$0xff] %v272
                %v274 = vld [vmem:[%s150 + $0x440] sm:$0xff]
                %275 = vst [vmem:[%s151 + $0x224] sm:$0xff] %v274
                %v276 = vld [vmem:[%s150 + $0x448] sm:$0xff]
                %277 = vst [vmem:[%s151 + $0x22c] sm:$0xff] %v276
                %v278 = vld [vmem:[%s150 + $0x450] sm:$0xff]
                %279 = vst [vmem:[%s151 + $0x234] sm:$0xff] %v278
              $region41: #{cnn_decoder.5} parent=35 // loop_footer
                %s149 = sadd.s32 1, %s145
              $region42: #{cnn_decoder.5} parent=35 // loop_footer_branch
                %144 = sbr.rel target = $region38
              $region43: #{cnn_decoder.5} parent=35 // loop_exit
                _
              %s281 = ssub.s32 16, 1
              loop: start=0, step=1, limit=1
              $region44: #{cnn_decoder.5} parent=35 // loop_pre_header
                _
              $region45: #{cnn_decoder.5} parent=35 // loop_header
                %s283 = sphi 0, %s287
                %p284 = scmp.ge.s32.totalorder %s283, 1
                %s288 = sphi %s142, %s142
                %s289 = sphi %s143, %s143
              $region46: #{cnn_decoder.5} parent=35 // loop_header_branch
                %286 = sbr.rel (%p284) target = $region50
              $region47: #{cnn_decoder.5} parent=35 // loop_body
                %v290 = vld [vmem:[%s288] sm:%s281]
                %291 = vst [vmem:[%s289] sm:%s281] %v290
                %v292 = vld [vmem:[%s288 + $0x48] sm:%s281]
                %293 = vst [vmem:[%s289 + $0x24] sm:%s281] %v292
                %v294 = vld [vmem:[%s288 + $0x90] sm:%s281]
                %295 = vst [vmem:[%s289 + $0x48] sm:%s281] %v294
                %v296 = vld [vmem:[%s288 + $0xd8] sm:%s281]
                %297 = vst [vmem:[%s289 + $0x6c] sm:%s281] %v296
                %v298 = vld [vmem:[%s288 + $0x120] sm:%s281]
                %299 = vst [vmem:[%s289 + $0x90] sm:%s281] %v298
                %v300 = vld [vmem:[%s288 + $0x168] sm:%s281]
                %301 = vst [vmem:[%s289 + $0xb4] sm:%s281] %v300
                %v302 = vld [vmem:[%s288 + $0x1b0] sm:%s281]
                %303 = vst [vmem:[%s289 + $0xd8] sm:%s281] %v302
                %v304 = vld [vmem:[%s288 + $0x1f8] sm:%s281]
                %305 = vst [vmem:[%s289 + $0xfc] sm:%s281] %v304
                %v306 = vld [vmem:[%s288 + $0x240] sm:%s281]
                %307 = vst [vmem:[%s289 + $0x120] sm:%s281] %v306
                %v308 = vld [vmem:[%s288 + $0x288] sm:%s281]
                %309 = vst [vmem:[%s289 + $0x144] sm:%s281] %v308
                %v310 = vld [vmem:[%s288 + $0x2d0] sm:%s281]
                %311 = vst [vmem:[%s289 + $0x168] sm:%s281] %v310
                %v312 = vld [vmem:[%s288 + $0x318] sm:%s281]
                %313 = vst [vmem:[%s289 + $0x18c] sm:%s281] %v312
                %v314 = vld [vmem:[%s288 + $0x360] sm:%s281]
                %315 = vst [vmem:[%s289 + $0x1b0] sm:%s281] %v314
                %v316 = vld [vmem:[%s288 + $0x3a8] sm:%s281]
                %317 = vst [vmem:[%s289 + $0x1d4] sm:%s281] %v316
                %v318 = vld [vmem:[%s288 + $0x3f0] sm:%s281]
                %319 = vst [vmem:[%s289 + $0x1f8] sm:%s281] %v318
                %v320 = vld [vmem:[%s288 + $0x438] sm:%s281]
                %321 = vst [vmem:[%s289 + $0x21c] sm:%s281] %v320
              $region48: #{cnn_decoder.5} parent=35 // loop_footer
                %s287 = sadd.s32 1, %s283
              $region49: #{cnn_decoder.5} parent=35 // loop_footer_branch
                %282 = sbr.rel target = $region45
              $region50: #{cnn_decoder.5} parent=35 // loop_exit
                _
            $region36: #{cnn_decoder.5} parent=31 // pred_fallthru
              _
          $region32: #{cnn_decoder.5} parent=27 // pred_fallthru
            _
          %322 = vnop
        $region28: #{cnn_decoder.5} parent=23 // pred_fallthru
          _
      $region24: #{cnn_decoder.5} parent=5 // pred_fallthru
        _
      %p323 = scmp.le.s32.totalorder 1, %s9
      %p324 = scmp.lt.s32.totalorder %s9, 3
      %p325 = pnand %p323, %p324
      %p326 = pneg %p325
      // Predicated region
      $region51: #{cnn_decoder.5} parent=5 // pred_check
        _
      $region52: #{cnn_decoder.5} parent=5 // pred_check_branch
        %328 = sbr.rel (%p325) target = $region54
      $region53: #{cnn_decoder.5} parent=5 // pred_region
        %s329 = ssub.s32 %s9, 1
        %s330 = sand.u32 %s43, 1
        %s331 = sand.u32 %s43, 1
        %s332 = smul.addr %s331, 576
        %s333 = scalar_lea.vmem [#allocation2], %s332
        // Predicated region
        $region55: #{cnn_decoder.5} parent=53 // pred_check
          %p334 = pneg %p56
        $region56: #{cnn_decoder.5} parent=53 // pred_check_branch
          %336 = sbr.rel (%p334) target = $region58
        $region57: #{cnn_decoder.5} parent=53 // pred_region
          _
        $region58: #{cnn_decoder.5} parent=53 // pred_fallthru
          _
        %p337 = pneg %p30
        %p338 = pneg %p27
        %s339 = sand.u32 %s43, 1
        %s340 = sand.u32 %s43, 1
        %s341 = smul.addr %s340, 576
        %s342 = scalar_lea.vmem [#allocation2], %s341
        %p343 = pneg %p56
        %p344 = pneg %p53
        %p345 = pneg %p77
        %p346 = pneg %p74
        %p347 = pneg %p103
        %p348 = pneg %p100
        %s349 = smul.u32 9, %s14
        %p350 = scmp.lt.s32.totalorder %s349, 17
        %s351 = scalar_select %p350, %s349, 17
        %s352 = smul.addr %s351, 8
        %s353 = scalar_lea.vmem %s3, %s352
        %s354 = smul.u32 9, %s14
        %s355 = smul.u32 9, %s14
        %p356 = scmp.lt.s32.totalorder %s355, 17
        %s357 = scalar_select %p356, %s355, 17
        %s358 = smul.addr %s357, 8
        %s359 = scalar_lea.vmem %s3, %s358
        %s360 = smul.u32 9, %s14
        %v361 = vld [vmem:[%s0] sm:$0xf]
        %v362 = vld [vmem:[%s333] sm:$0xff]
        %v363 = vld [vmem:[%s333 + $0x8] sm:$0xff]
        %v364 = vld [vmem:[%s333 + $0x10] sm:$0xff]
        %v365 = vld [vmem:[%s333 + $0x18] sm:$0xff]
        %v366 = vld [vmem:[%s333 + $0x20] sm:$0xf]
        %v367 = vld [vmem:[%s333 + $0x24] sm:$0xff]
        %v368 = vld [vmem:[%s333 + $0x2c] sm:$0xff]
        %v369 = vld [vmem:[%s333 + $0x34] sm:$0xff]
        %v370 = vld [vmem:[%s333 + $0x3c] sm:$0xff]
        %v371 = vld [vmem:[%s333 + $0x44] sm:$0xf]
        %v372 = vld [vmem:[%s333 + $0x48] sm:$0xff]
        %v373 = vld [vmem:[%s333 + $0x50] sm:$0xff]
        %v374 = vld [vmem:[%s333 + $0x58] sm:$0xff]
        %v375 = vld [vmem:[%s333 + $0x60] sm:$0xff]
        %v376 = vld [vmem:[%s333 + $0x68] sm:$0xf]
        %v377 = vld [vmem:[%s333 + $0x6c] sm:$0xff]
        %v378 = vld [vmem:[%s333 + $0x74] sm:$0xff]
        %v379 = vld [vmem:[%s333 + $0x7c] sm:$0xff]
        %v380 = vld [vmem:[%s333 + $0x84] sm:$0xff]
        %v381 = vld [vmem:[%s333 + $0x8c] sm:$0xf]
        %v382 = vld [vmem:[%s333 + $0x90] sm:$0xff]
        %v383 = vld [vmem:[%s333 + $0x98] sm:$0xff]
        %v384 = vld [vmem:[%s333 + $0xa0] sm:$0xff]
        %v385 = vld [vmem:[%s333 + $0xa8] sm:$0xff]
        %v386 = vld [vmem:[%s333 + $0xb0] sm:$0xf]
        %v387 = vld [vmem:[%s333 + $0xb4] sm:$0xff]
        %v388 = vld [vmem:[%s333 + $0xbc] sm:$0xff]
        %v389 = vld [vmem:[%s333 + $0xc4] sm:$0xff]
        %v390 = vld [vmem:[%s333 + $0xcc] sm:$0xff]
        %v391 = vld [vmem:[%s333 + $0xd4] sm:$0xf]
        %v392 = vld [vmem:[%s333 + $0xd8] sm:$0xff]
        %v393 = vld [vmem:[%s333 + $0xe0] sm:$0xff]
        %v394 = vld [vmem:[%s333 + $0xe8] sm:$0xff]
        %v395 = vld [vmem:[%s333 + $0xf0] sm:$0xff]
        %v396 = vld [vmem:[%s333 + $0xf8] sm:$0xf]
        %v397 = vld [vmem:[%s333 + $0xfc] sm:$0xff]
        %v398 = vld [vmem:[%s333 + $0x104] sm:$0xff]
        %v399 = vld [vmem:[%s333 + $0x10c] sm:$0xff]
        %v400 = vld [vmem:[%s333 + $0x114] sm:$0xff]
        %v401 = vld [vmem:[%s333 + $0x11c] sm:$0xf]
        %v402 = vld [vmem:[%s333 + $0x120] sm:$0xff]
        %v403 = vld [vmem:[%s333 + $0x128] sm:$0xff]
        %v404 = vld [vmem:[%s333 + $0x130] sm:$0xff]
        %v405 = vld [vmem:[%s333 + $0x138] sm:$0xff]
        %v406 = vld [vmem:[%s333 + $0x140] sm:$0xf]
        %v407 = vld [vmem:[%s333 + $0x144] sm:$0xff]
        %v408 = vld [vmem:[%s333 + $0x14c] sm:$0xff]
        %v409 = vld [vmem:[%s333 + $0x154] sm:$0xff]
        %v410 = vld [vmem:[%s333 + $0x15c] sm:$0xff]
        %v411 = vld [vmem:[%s333 + $0x164] sm:$0xf]
        %v412 = vld [vmem:[%s333 + $0x168] sm:$0xff]
        %v413 = vld [vmem:[%s333 + $0x170] sm:$0xff]
        %v414 = vld [vmem:[%s333 + $0x178] sm:$0xff]
        %v415 = vld [vmem:[%s333 + $0x180] sm:$0xff]
        %v416 = vld [vmem:[%s333 + $0x188] sm:$0xf]
        %v417 = vld [vmem:[%s333 + $0x18c] sm:$0xff]
        %v418 = vld [vmem:[%s333 + $0x194] sm:$0xff]
        %v419 = vld [vmem:[%s333 + $0x19c] sm:$0xff]
        %v420 = vld [vmem:[%s333 + $0x1a4] sm:$0xff]
        %v421 = vld [vmem:[%s333 + $0x1ac] sm:$0xf]
        %v422 = vld [vmem:[%s333 + $0x1b0] sm:$0xff]
        %v423 = vld [vmem:[%s333 + $0x1b8] sm:$0xff]
        %v424 = vld [vmem:[%s333 + $0x1c0] sm:$0xff]
        %v425 = vld [vmem:[%s333 + $0x1c8] sm:$0xff]
        %v426 = vld [vmem:[%s333 + $0x1d0] sm:$0xf]
        %v427 = vld [vmem:[%s333 + $0x1d4] sm:$0xff]
        %v428 = vld [vmem:[%s333 + $0x1dc] sm:$0xff]
        %v429 = vld [vmem:[%s333 + $0x1e4] sm:$0xff]
        %v430 = vld [vmem:[%s333 + $0x1ec] sm:$0xff]
        %v431 = vld [vmem:[%s333 + $0x1f4] sm:$0xf]
        %v432 = vld [vmem:[%s333 + $0x1f8] sm:$0xff]
        %v433 = vld [vmem:[%s333 + $0x200] sm:$0xff]
        %v434 = vld [vmem:[%s333 + $0x208] sm:$0xff]
        %v435 = vld [vmem:[%s333 + $0x210] sm:$0xff]
        %v436 = vld [vmem:[%s333 + $0x218] sm:$0xf]
        %v437 = vld [vmem:[%s333 + $0x21c] sm:$0xff]
        %v438 = vld [vmem:[%s333 + $0x224] sm:$0xff]
        %v439 = vld [vmem:[%s333 + $0x22c] sm:$0xff]
        %v440 = vld [vmem:[%s333 + $0x234] sm:$0xff]
        %v441 = vld [vmem:[%s333 + $0x23c] sm:$0xf]
        %v442 = vld [vmem:[%s2] sm:$0xff]
        %444 = vset.pattern.permute.xlu0 0
        %445 = vperm.xlu0 %444, %v442
        %v446 = vpop.permute.xlu0 %445
        %v528 = vunpack.c.l.b16 %v362
        %v529 = vunpack.c.h.b16 %v362
        %v530 = vunpack.c.l.b16 %v363
        %v531 = vunpack.c.h.b16 %v363
        %v532 = vunpack.c.l.b16 %v364
        %v533 = vunpack.c.h.b16 %v364
        %v534 = vunpack.c.l.b16 %v365
        %v535 = vunpack.c.h.b16 %v365
        %v536 = vunpack.c.l.b16 %v366
        %v537 = vunpack.c.l.b16 %v367
        %v538 = vunpack.c.h.b16 %v367
        %v539 = vunpack.c.l.b16 %v368
        %v540 = vunpack.c.h.b16 %v368
        %v541 = vunpack.c.l.b16 %v369
        %v542 = vunpack.c.h.b16 %v369
        %v543 = vunpack.c.l.b16 %v370
        %v544 = vunpack.c.h.b16 %v370
        %v545 = vunpack.c.l.b16 %v371
        %v546 = vunpack.c.l.b16 %v372
        %v547 = vunpack.c.h.b16 %v372
        %v548 = vunpack.c.l.b16 %v373
        %v549 = vunpack.c.h.b16 %v373
        %v550 = vunpack.c.l.b16 %v374
        %v551 = vunpack.c.h.b16 %v374
        %v552 = vunpack.c.l.b16 %v375
        %v553 = vunpack.c.h.b16 %v375
        %v554 = vunpack.c.l.b16 %v376
        %v555 = vunpack.c.l.b16 %v377
        %v556 = vunpack.c.h.b16 %v377
        %v557 = vunpack.c.l.b16 %v378
        %v558 = vunpack.c.h.b16 %v378
        %v559 = vunpack.c.l.b16 %v379
        %v560 = vunpack.c.h.b16 %v379
        %v561 = vunpack.c.l.b16 %v380
        %v562 = vunpack.c.h.b16 %v380
        %v563 = vunpack.c.l.b16 %v381
        %v564 = vunpack.c.l.b16 %v382
        %v565 = vunpack.c.h.b16 %v382
        %v566 = vunpack.c.l.b16 %v383
        %v567 = vunpack.c.h.b16 %v383
        %v568 = vunpack.c.l.b16 %v384
        %v569 = vunpack.c.h.b16 %v384
        %v570 = vunpack.c.l.b16 %v385
        %v571 = vunpack.c.h.b16 %v385
        %v572 = vunpack.c.l.b16 %v386
        %v573 = vunpack.c.l.b16 %v387
        %v574 = vunpack.c.h.b16 %v387
        %v575 = vunpack.c.l.b16 %v388
        %v576 = vunpack.c.h.b16 %v388
        %v577 = vunpack.c.l.b16 %v389
        %v578 = vunpack.c.h.b16 %v389
        %v579 = vunpack.c.l.b16 %v390
        %v580 = vunpack.c.h.b16 %v390
        %v581 = vunpack.c.l.b16 %v391
        %v582 = vunpack.c.l.b16 %v392
        %v583 = vunpack.c.h.b16 %v392
        %v584 = vunpack.c.l.b16 %v393
        %v585 = vunpack.c.h.b16 %v393
        %v586 = vunpack.c.l.b16 %v394
        %v587 = vunpack.c.h.b16 %v394
        %v588 = vunpack.c.l.b16 %v395
        %v589 = vunpack.c.h.b16 %v395
        %v590 = vunpack.c.l.b16 %v396
        %v591 = vunpack.c.l.b16 %v397
        %v592 = vunpack.c.h.b16 %v397
        %v593 = vunpack.c.l.b16 %v398
        %v594 = vunpack.c.h.b16 %v398
        %v595 = vunpack.c.l.b16 %v399
        %v596 = vunpack.c.h.b16 %v399
        %v597 = vunpack.c.l.b16 %v400
        %v598 = vunpack.c.h.b16 %v400
        %v599 = vunpack.c.l.b16 %v401
        %v600 = vunpack.c.l.b16 %v402
        %v601 = vunpack.c.h.b16 %v402
        %v602 = vunpack.c.l.b16 %v403
        %v603 = vunpack.c.h.b16 %v403
        %v604 = vunpack.c.l.b16 %v404
        %v605 = vunpack.c.h.b16 %v404
        %v606 = vunpack.c.l.b16 %v405
        %v607 = vunpack.c.h.b16 %v405
        %v608 = vunpack.c.l.b16 %v406
        %v609 = vunpack.c.l.b16 %v407
        %v610 = vunpack.c.h.b16 %v407
        %v611 = vunpack.c.l.b16 %v408
        %v612 = vunpack.c.h.b16 %v408
        %v613 = vunpack.c.l.b16 %v409
        %v614 = vunpack.c.h.b16 %v409
        %v615 = vunpack.c.l.b16 %v410
        %v616 = vunpack.c.h.b16 %v410
        %v617 = vunpack.c.l.b16 %v411
        %v618 = vunpack.c.l.b16 %v412
        %v619 = vunpack.c.h.b16 %v412
        %v620 = vunpack.c.l.b16 %v413
        %v621 = vunpack.c.h.b16 %v413
        %v622 = vunpack.c.l.b16 %v414
        %v623 = vunpack.c.h.b16 %v414
        %v624 = vunpack.c.l.b16 %v415
        %v625 = vunpack.c.h.b16 %v415
        %v626 = vunpack.c.l.b16 %v416
        %v627 = vunpack.c.l.b16 %v417
        %v628 = vunpack.c.h.b16 %v417
        %v629 = vunpack.c.l.b16 %v418
        %v630 = vunpack.c.h.b16 %v418
        %v631 = vunpack.c.l.b16 %v419
        %v632 = vunpack.c.h.b16 %v419
        %v633 = vunpack.c.l.b16 %v420
        %v634 = vunpack.c.h.b16 %v420
        %v635 = vunpack.c.l.b16 %v421
        %v636 = vunpack.c.l.b16 %v422
        %v637 = vunpack.c.h.b16 %v422
        %v638 = vunpack.c.l.b16 %v423
        %v639 = vunpack.c.h.b16 %v423
        %v640 = vunpack.c.l.b16 %v424
        %v641 = vunpack.c.h.b16 %v424
        %v642 = vunpack.c.l.b16 %v425
        %v643 = vunpack.c.h.b16 %v425
        %v644 = vunpack.c.l.b16 %v426
        %v645 = vunpack.c.l.b16 %v427
        %v646 = vunpack.c.h.b16 %v427
        %v647 = vunpack.c.l.b16 %v428
        %v648 = vunpack.c.h.b16 %v428
        %v649 = vunpack.c.l.b16 %v429
        %v650 = vunpack.c.h.b16 %v429
        %v651 = vunpack.c.l.b16 %v430
        %v652 = vunpack.c.h.b16 %v430
        %v653 = vunpack.c.l.b16 %v431
        %v654 = vunpack.c.l.b16 %v432
        %v655 = vunpack.c.h.b16 %v432
        %v656 = vunpack.c.l.b16 %v433
        %v657 = vunpack.c.h.b16 %v433
        %v658 = vunpack.c.l.b16 %v434
        %v659 = vunpack.c.h.b16 %v434
        %v660 = vunpack.c.l.b16 %v435
        %v661 = vunpack.c.h.b16 %v435
        %v662 = vunpack.c.l.b16 %v436
        %v663 = vunpack.c.l.b16 %v437
        %v664 = vunpack.c.h.b16 %v437
        %v665 = vunpack.c.l.b16 %v438
        %v666 = vunpack.c.h.b16 %v438
        %v667 = vunpack.c.l.b16 %v439
        %v668 = vunpack.c.h.b16 %v439
        %v669 = vunpack.c.l.b16 %v440
        %v670 = vunpack.c.h.b16 %v440
        %v671 = vunpack.c.l.b16 %v441
        %v672 = vpack.c.b16 %v537, %v528
        %v673 = vpack.c.b16 %v538, %v529
        %v674 = vpack.c.b16 %v539, %v530
        %v675 = vpack.c.b16 %v540, %v531
        %v676 = vpack.c.b16 %v541, %v532
        %v677 = vpack.c.b16 %v542, %v533
        %v678 = vpack.c.b16 %v543, %v534
        %v679 = vpack.c.b16 %v544, %v535
        %v680 = vpack.c.b16 %v545, %v536
        %v681 = vpack.c.b16 %v555, %v546
        %v682 = vpack.c.b16 %v556, %v547
        %v683 = vpack.c.b16 %v557, %v548
        %v684 = vpack.c.b16 %v558, %v549
        %v685 = vpack.c.b16 %v559, %v550
        %v686 = vpack.c.b16 %v560, %v551
        %v687 = vpack.c.b16 %v561, %v552
        %v688 = vpack.c.b16 %v562, %v553
        %v689 = vpack.c.b16 %v563, %v554
        %v690 = vpack.c.b16 %v573, %v564
        %v691 = vpack.c.b16 %v574, %v565
        %v692 = vpack.c.b16 %v575, %v566
        %v693 = vpack.c.b16 %v576, %v567
        %v694 = vpack.c.b16 %v577, %v568
        %v695 = vpack.c.b16 %v578, %v569
        %v696 = vpack.c.b16 %v579, %v570
        %v697 = vpack.c.b16 %v580, %v571
        %v698 = vpack.c.b16 %v581, %v572
        %v699 = vpack.c.b16 %v591, %v582
        %v700 = vpack.c.b16 %v592, %v583
        %v701 = vpack.c.b16 %v593, %v584
        %v702 = vpack.c.b16 %v594, %v585
        %v703 = vpack.c.b16 %v595, %v586
        %v704 = vpack.c.b16 %v596, %v587
        %v705 = vpack.c.b16 %v597, %v588
        %v706 = vpack.c.b16 %v598, %v589
        %v707 = vpack.c.b16 %v599, %v590
        %v708 = vpack.c.b16 %v609, %v600
        %v709 = vpack.c.b16 %v610, %v601
        %v710 = vpack.c.b16 %v611, %v602
        %v711 = vpack.c.b16 %v612, %v603
        %v712 = vpack.c.b16 %v613, %v604
        %v713 = vpack.c.b16 %v614, %v605
        %v714 = vpack.c.b16 %v615, %v606
        %v715 = vpack.c.b16 %v616, %v607
        %v716 = vpack.c.b16 %v617, %v608
        %v717 = vpack.c.b16 %v627, %v618
        %v718 = vpack.c.b16 %v628, %v619
        %v719 = vpack.c.b16 %v629, %v620
        %v720 = vpack.c.b16 %v630, %v621
        %v721 = vpack.c.b16 %v631, %v622
        %v722 = vpack.c.b16 %v632, %v623
        %v723 = vpack.c.b16 %v633, %v624
        %v724 = vpack.c.b16 %v634, %v625
        %v725 = vpack.c.b16 %v635, %v626
        %v726 = vpack.c.b16 %v645, %v636
        %v727 = vpack.c.b16 %v646, %v637
        %v728 = vpack.c.b16 %v647, %v638
        %v729 = vpack.c.b16 %v648, %v639
        %v730 = vpack.c.b16 %v649, %v640
        %v731 = vpack.c.b16 %v650, %v641
        %v732 = vpack.c.b16 %v651, %v642
        %v733 = vpack.c.b16 %v652, %v643
        %v734 = vpack.c.b16 %v653, %v644
        %v735 = vpack.c.b16 %v663, %v654
        %v736 = vpack.c.b16 %v664, %v655
        %v737 = vpack.c.b16 %v665, %v656
        %v738 = vpack.c.b16 %v666, %v657
        %v739 = vpack.c.b16 %v667, %v658
        %v740 = vpack.c.b16 %v668, %v659
        %v741 = vpack.c.b16 %v669, %v660
        %v742 = vpack.c.b16 %v670, %v661
        %v743 = vpack.c.b16 %v671, %v662
        %816 = vmatpush.bf16.msra.mxu0 %v735
        %817 = vmatpush.bf16.msra.mxu0 %v726
        %818 = vmatpush.bf16.msra.mxu0 %v717
        %819 = vmatpush.bf16.msra.mxu0 %v708
        %820 = vmatpush.bf16.msra.mxu0 %v699
        %821 = vmatpush.bf16.msra.mxu0 %v690
        %822 = vmatpush.bf16.msra.mxu0 %v681
        %823 = vmatpush.bf16.msra.mxu0 %v672
        %824 = vmatmul.bf16.gmra.mxu0 %v361
        %v825 = vpop.f32.mrf.mxu0
        %v826 = vadd.f32 %v446, %v825
        %v827 = vpop.f32.mrf.mxu0
        %828 = vdwg.mxu0
        %829 = vmatpush.bf16.msra.mxu0 %v736
        %830 = vmatpush.bf16.msra.mxu0 %v727
        %831 = vmatpush.bf16.msra.mxu0 %v718
        %832 = vmatpush.bf16.msra.mxu0 %v709
        %833 = vmatpush.bf16.msra.mxu0 %v700
        %834 = vmatpush.bf16.msra.mxu0 %v691
        %835 = vmatpush.bf16.msra.mxu0 %v682
        %836 = vmatpush.bf16.msra.mxu0 %v673
        %837 = vmatmul.bf16.gmra.mxu0 %v361
        %v838 = vpop.f32.mrf.mxu0
        %v839 = vadd.f32 %v446, %v838
        %v840 = vpop.f32.mrf.mxu0
        %841 = vdwg.mxu0
        %842 = vmatpush.bf16.msra.mxu0 %v737
        %843 = vmatpush.bf16.msra.mxu0 %v728
        %844 = vmatpush.bf16.msra.mxu0 %v719
        %845 = vmatpush.bf16.msra.mxu0 %v710
        %846 = vmatpush.bf16.msra.mxu0 %v701
        %847 = vmatpush.bf16.msra.mxu0 %v692
        %848 = vmatpush.bf16.msra.mxu0 %v683
        %849 = vmatpush.bf16.msra.mxu0 %v674
        %850 = vmatmul.bf16.gmra.mxu0 %v361
        %v851 = vpop.f32.mrf.mxu0
        %v852 = vadd.f32 %v446, %v851
        %v853 = vpop.f32.mrf.mxu0
        %854 = vdwg.mxu0
        %855 = vmatpush.bf16.msra.mxu0 %v738
        %856 = vmatpush.bf16.msra.mxu0 %v729
        %857 = vmatpush.bf16.msra.mxu0 %v720
        %858 = vmatpush.bf16.msra.mxu0 %v711
        %859 = vmatpush.bf16.msra.mxu0 %v702
        %860 = vmatpush.bf16.msra.mxu0 %v693
        %861 = vmatpush.bf16.msra.mxu0 %v684
        %862 = vmatpush.bf16.msra.mxu0 %v675
        %863 = vmatmul.bf16.gmra.mxu0 %v361
        %v864 = vpop.f32.mrf.mxu0
        %v865 = vadd.f32 %v446, %v864
        %v866 = vpop.f32.mrf.mxu0
        %867 = vdwg.mxu0
        %868 = vmatpush.bf16.msra.mxu0 %v739
        %869 = vmatpush.bf16.msra.mxu0 %v730
        %870 = vmatpush.bf16.msra.mxu0 %v721
        %871 = vmatpush.bf16.msra.mxu0 %v712
        %872 = vmatpush.bf16.msra.mxu0 %v703
        %873 = vmatpush.bf16.msra.mxu0 %v694
        %874 = vmatpush.bf16.msra.mxu0 %v685
        %875 = vmatpush.bf16.msra.mxu0 %v676
        %876 = vmatmul.bf16.gmra.mxu0 %v361
        %v877 = vpop.f32.mrf.mxu0
        %v878 = vadd.f32 %v446, %v877
        %v879 = vpop.f32.mrf.mxu0
        %880 = vdwg.mxu0
        %881 = vmatpush.bf16.msra.mxu0 %v740
        %882 = vmatpush.bf16.msra.mxu0 %v731
        %883 = vmatpush.bf16.msra.mxu0 %v722
        %884 = vmatpush.bf16.msra.mxu0 %v713
        %885 = vmatpush.bf16.msra.mxu0 %v704
        %886 = vmatpush.bf16.msra.mxu0 %v695
        %887 = vmatpush.bf16.msra.mxu0 %v686
        %888 = vmatpush.bf16.msra.mxu0 %v677
        %889 = vmatmul.bf16.gmra.mxu0 %v361
        %v890 = vpop.f32.mrf.mxu0
        %v891 = vadd.f32 %v446, %v890
        %v892 = vpop.f32.mrf.mxu0
        %893 = vdwg.mxu0
        %894 = vmatpush.bf16.msra.mxu0 %v741
        %895 = vmatpush.bf16.msra.mxu0 %v732
        %896 = vmatpush.bf16.msra.mxu0 %v723
        %897 = vmatpush.bf16.msra.mxu0 %v714
        %898 = vmatpush.bf16.msra.mxu0 %v705
        %899 = vmatpush.bf16.msra.mxu0 %v696
        %900 = vmatpush.bf16.msra.mxu0 %v687
        %901 = vmatpush.bf16.msra.mxu0 %v678
        %902 = vmatmul.bf16.gmra.mxu0 %v361
        %v903 = vpop.f32.mrf.mxu0
        %v904 = vadd.f32 %v446, %v903
        %v905 = vpop.f32.mrf.mxu0
        %906 = vdwg.mxu0
        %907 = vmatpush.bf16.msra.mxu0 %v742
        %908 = vmatpush.bf16.msra.mxu0 %v733
        %909 = vmatpush.bf16.msra.mxu0 %v724
        %910 = vmatpush.bf16.msra.mxu0 %v715
        %911 = vmatpush.bf16.msra.mxu0 %v706
        %912 = vmatpush.bf16.msra.mxu0 %v697
        %913 = vmatpush.bf16.msra.mxu0 %v688
        %914 = vmatpush.bf16.msra.mxu0 %v679
        %915 = vmatmul.bf16.gmra.mxu0 %v361
        %v916 = vpop.f32.mrf.mxu0
        %v917 = vadd.f32 %v446, %v916
        %v918 = vpop.f32.mrf.mxu0
        %919 = vdwg.mxu0
        %920 = vmatpush.bf16.msra.mxu0 %v743
        %921 = vmatpush.bf16.msra.mxu0 %v734
        %922 = vmatpush.bf16.msra.mxu0 %v725
        %923 = vmatpush.bf16.msra.mxu0 %v716
        %924 = vmatpush.bf16.msra.mxu0 %v707
        %925 = vmatpush.bf16.msra.mxu0 %v698
        %926 = vmatpush.bf16.msra.mxu0 %v689
        %927 = vmatpush.bf16.msra.mxu0 %v680
        %928 = vmatmul.bf16.gmra.mxu0 %v361
        %v929 = vpop.f32.mrf.mxu0
        %v930 = vadd.f32 %v446, %v929
        %v931 = vpop.f32.mrf.mxu0
        %932 = vdwg.mxu0
        %933 = vst [vmem:[%s359] sm:$0xff] %v826
        %934 = vst [vmem:[%s359 + $0x8] sm:$0xff] %v839
        %935 = vst [vmem:[%s359 + $0x10] sm:$0xff] %v852
        %936 = vst [vmem:[%s359 + $0x18] sm:$0xff] %v865
        %937 = vst [vmem:[%s359 + $0x20] sm:$0xff] %v878
        %938 = vst [vmem:[%s359 + $0x28] sm:$0xff] %v891
        %939 = vst [vmem:[%s359 + $0x30] sm:$0xff] %v904
        %940 = vst [vmem:[%s359 + $0x38] sm:$0xff] %v917
        %941 = vst [vmem:[%s359 + $0x40] sm:$0xff] %v930
        %s942 = smul.u32 9, %s14
        %p943 = scmp.lt.s32.totalorder %s942, 17
        %s944 = scalar_select %p943, %s942, 17
        %s945 = smul.addr %s944, 8
        %s946 = scalar_lea.vmem %s3, %s945
        // Predicated region
        $region59: #{cnn_decoder.5} parent=53 // pred_check
          %p947 = pneg %p100
        $region60: #{cnn_decoder.5} parent=53 // pred_check_branch
          %949 = sbr.rel (%p947) target = $region62
        $region61: #{cnn_decoder.5} parent=53 // pred_region
          %s950 = smul.u32 9, %s14
        $region62: #{cnn_decoder.5} parent=53 // pred_fallthru
          _
      $region54: #{cnn_decoder.5} parent=5 // pred_fallthru
        _
      %p951 = scmp.le.s32.totalorder 2, %s9
      // Predicated region
      $region63: #{cnn_decoder.5} parent=5 // pred_check
        %p952 = pneg %p951
      $region64: #{cnn_decoder.5} parent=5 // pred_check_branch
        %954 = sbr.rel (%p952) target = $region66
      $region65: #{cnn_decoder.5} parent=5 // pred_region
        %s955 = ssub.s32 %s9, 2
        // Predicated region
        $region67: #{cnn_decoder.5} parent=65 // pred_check
          %p956 = pneg %p106
        $region68: #{cnn_decoder.5} parent=65 // pred_check_branch
          %958 = sbr.rel (%p956) target = $region70
        $region69: #{cnn_decoder.5} parent=65 // pred_region
          %s959 = smul.u32 9, %s15
          %p960 = scmp.lt.s32.totalorder %s959, 17
          %s961 = scalar_select %p960, %s959, 17
          %s962 = smul.addr %s961, 8
          %s963 = scalar_lea.vmem %s3, %s962
        $region70: #{cnn_decoder.5} parent=65 // pred_fallthru
          _
      $region66: #{cnn_decoder.5} parent=5 // pred_fallthru
        _
    $region6: #{cnn_decoder.5} parent=1 // loop_footer
      %s13 = sadd.s32 1, %s9
    $region7: #{cnn_decoder.5} parent=1 // loop_footer_branch
      %8 = sbr.rel target = $region3
    $region8: #{cnn_decoder.5} parent=1 // loop_exit
      _

</llo_original>
